<compile_context>
chip_gen: v7x
topology: tpu7x:2x2x1
jax: 0.10.0
libtpu: 0.0.40
codegen_flags: <defaults>
</compile_context>

<pallas_src>
import functools

import jax
import jax.numpy as jnp
from jax.experimental import pallas as pl
from jax.experimental.pallas import tpu as pltpu

# ---------------- config ----------------
VOCAB = 128
HIDDEN = 32
LAYERS = 2
HEADS = 2
HEAD_DIM = HIDDEN // HEADS
INTER = 64
MAX_POS = 64
NUM_LABELS = 40
QKV_PAD = 128          # 3*HIDDEN = 96 -> 128 lane-dense
INTER_PAD = 128        # INTER   = 64 -> 128 lane-dense
CLS_PAD = 128          # NUM_LABELS = 40 -> 128 lane-dense
LN_EPS = 1e-12


# ---------------- per-layer kernel (grid over layers) ----------------
def _bert_layer_kernel(x_emb_ref, mask_ref, emb_g_ref, emb_b_ref,
                       qkv_w_ref, qkv_b_ref, ao_w_ref, ao_b_ref,
                       ao_g_ref, ao_beta_ref, i_w_ref, i_b_ref,
                       o_w_ref, o_b_ref, o_g_ref, o_beta_ref,
                       pool_w_ref, pool_b_ref, cls_w_ref, cls_b_ref,
                       out_ref, x_scr, *, batch, seq):
    """One encoder layer per grid step; activations carried in VMEM scratch."""
    f32 = jnp.float32
    bf16 = jnp.bfloat16
    l = pl.program_id(0)

    def layernorm(x, g, b):
        mu = jnp.mean(x, axis=-1, keepdims=True)
        var = jnp.mean(jnp.square(x - mu), axis=-1, keepdims=True)
        return (x - mu) * jax.lax.rsqrt(var + LN_EPS) * g + b

    def softmax_last(s):
        s = s - jnp.max(s, axis=-1, keepdims=True)
        p = jnp.exp(s)
        return p * pl.reciprocal(jnp.sum(p, axis=-1, keepdims=True), approx=True)

    # --- step 0: embedding LayerNorm into the resident activation scratch ---
    # (embedding dropout p=0.1 -> identity at inference)
    @pl.when(l == 0)
    def _():
        x_scr[...] = layernorm(x_emb_ref[...], emb_g_ref[...], emb_b_ref[...])

    x = x_scr[...]                               # (B*S, H) f32, carried activation
    add_mask = mask_ref[...]                     # (B*S, B*S) f32, built once in wrapper

    # --- fused QKV projection: one (B*S,H) @ (H,128) lane-dense MXU pass ---
    qkv = jnp.dot(x.astype(bf16), qkv_w_ref[0],
                  preferred_element_type=f32) + qkv_b_ref[0]        # (B*S, 128) f32

    # --- 2-D block-diagonal self-attention (no reshapes, no batched einsums) ---
    scale = 1.0 / float(HEAD_DIM) ** 0.5
    ctx_heads = []
    for h in range(HEADS):                       # static unroll (HEADS small)
        qh = qkv[:, h * HEAD_DIM:(h + 1) * HEAD_DIM].astype(bf16)
        kh = qkv[:, HIDDEN + h * HEAD_DIM:HIDDEN + (h + 1) * HEAD_DIM].astype(bf16)
        vh = qkv[:, 2 * HIDDEN + h * HEAD_DIM:2 * HIDDEN + (h + 1) * HEAD_DIM].astype(bf16)
        # scores: contract dim 1 with dim 1 -> (B*S, B*S), q @ k^T without a transpose
        s = jax.lax.dot_general(qh, kh, (((1,), (1,)), ((), ())),
                                preferred_element_type=f32) * scale
        p = softmax_last(s + add_mask)           # cross-batch / padded keys -> prob 0
        ctx_heads.append(jnp.dot(p.astype(bf16), vh, preferred_element_type=f32))
    ctx = jnp.concatenate(ctx_heads, axis=1)     # (B*S, H): head merge via lane concat
    attn = jnp.dot(ctx.astype(bf16), ao_w_ref[0],
                   preferred_element_type=f32) + ao_b_ref[0]        # ONE output proj
    x = layernorm(attn + x, ao_g_ref[0], ao_beta_ref[0])

    # --- feed forward (intermediate lane-padded to 128; padding exact zeros) ---
    hmid = jnp.dot(x.astype(bf16), i_w_ref[0],
                   preferred_element_type=f32) + i_b_ref[0]         # (B*S, 128) f32
    # TODO(synk): HF BERT uses exact erf-GELU; tanh approximation used here for
    # robust Mosaic lowering of the transcendental.
    hmid = jax.nn.gelu(hmid, approximate=True)
    ffn = jnp.dot(hmid.astype(bf16), o_w_ref[0],
                  preferred_element_type=f32) + o_b_ref[0]
    x = layernorm(ffn + x, o_g_ref[0], o_beta_ref[0])

    x_scr[...] = x                               # carry to next layer / grid step

    # --- last step: [CLS] rows -> tanh pooler -> classifier (lane-dense out) ---
    @pl.when(l == pl.num_programs(0) - 1)
    def _():
        # rows 0, S, 2S, ... via cheap static sublane slices (no iota/select matmul)
        cls_tok = jnp.concatenate(
            [x[b * seq:b * seq + 1, :] for b in range(batch)], axis=0)   # (B, H)
        pooled = jnp.tanh(jnp.dot(cls_tok.astype(bf16), pool_w_ref[...],
                                  preferred_element_type=f32) + pool_b_ref[...])
        # classifier dropout (p=0.3) -> identity at inference
        out_ref[...] = (jnp.dot(pooled.astype(bf16), cls_w_ref[...],
                                preferred_element_type=f32) + cls_b_ref[...])


# ---------------- deterministic parameter init ----------------
def init_params(key):
    keys = iter(jax.random.split(key, 64))

    def nrm(shape, scale=0.02):
        return scale * jax.random.normal(next(keys), shape, jnp.float32)

    bf16 = jnp.bfloat16
    qkv_w, ao_w, i_w, o_w = [], [], [], []
    ln1_g, ln1_b, ln2_g, ln2_b = [], [], [], []
    for _ in range(LAYERS):
        q = nrm((HIDDEN, HIDDEN)); k = nrm((HIDDEN, HIDDEN)); v = nrm((HIDDEN, HIDDEN))
        qkv = jnp.concatenate([q, k, v], axis=1)                       # (H, 96)
        qkv_w.append(jnp.pad(qkv, ((0, 0), (0, QKV_PAD - 3 * HIDDEN))))
        ao_w.append(nrm((HIDDEN, HIDDEN)))
        i_w.append(jnp.pad(nrm((HIDDEN, INTER)), ((0, 0), (0, INTER_PAD - INTER))))
        o_w.append(jnp.pad(nrm((INTER, HIDDEN)), ((0, INTER_PAD - INTER), (0, 0))))
        ln1_g.append(jnp.ones((1, HIDDEN), jnp.float32))
        ln1_b.append(jnp.zeros((1, HIDDEN), jnp.float32))
        ln2_g.append(jnp.ones((1, HIDDEN), jnp.float32))
        ln2_b.append(jnp.zeros((1, HIDDEN), jnp.float32))

    params = {
        "word_emb": nrm((VOCAB, HIDDEN)),
        "pos_emb": nrm((MAX_POS, HIDDEN)),
        "type_emb": nrm((2, HIDDEN)),
        "emb_ln_g": jnp.ones((1, HIDDEN), jnp.float32),
        "emb_ln_b": jnp.zeros((1, HIDDEN), jnp.float32),
        # weights in bf16 (MXU-native, half the DMA/VMEM bytes); biases / LN in f32
        "qkv_w": jnp.stack(qkv_w).astype(bf16),
        "qkv_b": jnp.zeros((LAYERS, 1, QKV_PAD), jnp.float32),
        "ao_w": jnp.stack(ao_w).astype(bf16),
        "ao_b": jnp.zeros((LAYERS, 1, HIDDEN), jnp.float32),
        "ao_ln_g": jnp.stack(ln1_g), "ao_ln_b": jnp.stack(ln1_b),
        "i_w": jnp.stack(i_w).astype(bf16),
        "i_b": jnp.zeros((LAYERS, 1, INTER_PAD), jnp.float32),
        "o_w": jnp.stack(o_w).astype(bf16),
        "o_b": jnp.zeros((LAYERS, 1, HIDDEN), jnp.float32),
        "o_ln_g": jnp.stack(ln2_g), "o_ln_b": jnp.stack(ln2_b),
        "pool_w": nrm((HIDDEN, HIDDEN)).astype(bf16),
        "pool_b": jnp.zeros((1, HIDDEN), jnp.float32),
        # classifier zero-padded to 128 output lanes; padded logit lanes are exactly
        # zero and sliced off in the wrapper.
        "cls_w": jnp.pad(nrm((HIDDEN, NUM_LABELS)),
                         ((0, 0), (0, CLS_PAD - NUM_LABELS))).astype(bf16),
        "cls_b": jnp.zeros((1, CLS_PAD), jnp.float32),
    }
    return params


# ---------------- forward pass ----------------
def bert_multilabel_forward(params, input_ids, attention_mask):
    B, S = input_ids.shape
    bs = B * S

    # Embedding gathers are glue (plain JAX / XLA); token_type_ids default to 0.
    x = (params["word_emb"][input_ids]
         + params["pos_emb"][:S][None, :, :]
         + params["type_emb"][0][None, None, :]).reshape(bs, HIDDEN)

    # Block-diagonal additive attention mask, built ONCE (hoisted out of all layer /
    # head loops): padded keys get -10000 (HF convention, identical denominator
    # contribution), cross-batch pairs get -1e9 (exp underflows to exactly 0).
    mask_f = attention_mask.astype(jnp.float32).reshape(1, bs)        # (1, B*S)
    key_pad = (1.0 - mask_f) * -10000.0
    bid = jnp.arange(bs, dtype=jnp.int32) // S
    same_batch = bid[:, None] == bid[None, :]
    add_mask = jnp.where(same_batch, key_pad, -1e9).astype(jnp.float32)  # (B*S, B*S)

    grid_spec = pltpu.PrefetchScalarGridSpec(
        num_scalar_prefetch=0,
        grid=(LAYERS,),
        in_specs=[
            pl.BlockSpec((bs, HIDDEN), lambda l: (0, 0)),               # x_emb (resident)
            pl.BlockSpec((bs, bs), lambda l: (0, 0)),                   # add_mask (resident)
            pl.BlockSpec((1, HIDDEN), lambda l: (0, 0)),                # emb_ln_g
            pl.BlockSpec((1, HIDDEN), lambda l: (0, 0)),                # emb_ln_b
            pl.BlockSpec((1, HIDDEN, QKV_PAD), lambda l: (l, 0, 0)),    # qkv_w (streamed)
            pl.BlockSpec((1, 1, QKV_PAD), lambda l: (l, 0, 0)),         # qkv_b
            pl.BlockSpec((1, HIDDEN, HIDDEN), lambda l: (l, 0, 0)),     # ao_w
            pl.BlockSpec((1, 1, HIDDEN), lambda l: (l, 0, 0)),          # ao_b
            pl.BlockSpec((1, 1, HIDDEN), lambda l: (l, 0, 0)),          # ao_ln_g
            pl.BlockSpec((1, 1, HIDDEN), lambda l: (l, 0, 0)),          # ao_ln_b
            pl.BlockSpec((1, HIDDEN, INTER_PAD), lambda l: (l, 0, 0)),  # i_w
            pl.BlockSpec((1, 1, INTER_PAD), lambda l: (l, 0, 0)),       # i_b
            pl.BlockSpec((1, INTER_PAD, HIDDEN), lambda l: (l, 0, 0)),  # o_w
            pl.BlockSpec((1, 1, HIDDEN), lambda l: (l, 0, 0)),          # o_b
            pl.BlockSpec((1, 1, HIDDEN), lambda l: (l, 0, 0)),          # o_ln_g
            pl.BlockSpec((1, 1, HIDDEN), lambda l: (l, 0, 0)),          # o_ln_b
            pl.BlockSpec((HIDDEN, HIDDEN), lambda l: (0, 0)),           # pool_w (resident)
            pl.BlockSpec((1, HIDDEN), lambda l: (0, 0)),                # pool_b
            pl.BlockSpec((HIDDEN, CLS_PAD), lambda l: (0, 0)),          # cls_w (resident)
            pl.BlockSpec((1, CLS_PAD), lambda l: (0, 0)),               # cls_b
        ],
        out_specs=pl.BlockSpec((B, CLS_PAD), lambda l: (0, 0)),         # written at last step
        scratch_shapes=[pltpu.VMEM((bs, HIDDEN), jnp.float32)],         # carried activation
    )

    logits_pad = pl.pallas_call(
        functools.partial(_bert_layer_kernel, batch=B, seq=S),
        out_shape=jax.ShapeDtypeStruct((B, CLS_PAD), jnp.float32),
        grid_spec=grid_spec,
        compiler_params=pltpu.CompilerParams(
            # layer axis carries the residual stream -> sequential ("arbitrary").
            dimension_semantics=("arbitrary",)),
    )(x, add_mask,
      params["emb_ln_g"], params["emb_ln_b"],
      params["qkv_w"], params["qkv_b"],
      params["ao_w"], params["ao_b"], params["ao_ln_g"], params["ao_ln_b"],
      params["i_w"], params["i_b"], params["o_w"], params["o_b"],
      params["o_ln_g"], params["o_ln_b"],
      params["pool_w"], params["pool_b"], params["cls_w"], params["cls_b"])

    return logits_pad[:, :NUM_LABELS].reshape(-1, 10, 4)


# ---------------- main ----------------
if __name__ == "__main__":
    key = jax.random.PRNGKey(0)
    pkey, ikey = jax.random.split(key)

    params = init_params(pkey)

    B, S = 2, 8
    input_ids = jax.random.randint(ikey, (B, S), 0, VOCAB, dtype=jnp.int32)
    attention_mask = jnp.array(
        [[1, 1, 1, 1, 1, 1, 1, 1],
         [1, 1, 1, 1, 1, 0, 0, 0]], dtype=jnp.int32)

    fwd = jax.jit(bert_multilabel_forward)
    logits = fwd(params, input_ids, attention_mask)
    jax.block_until_ready(logits)

    assert logits.shape == (B, 10, 4), logits.shape
    assert jnp.all(jnp.isfinite(logits))
    print("KERNEL_OK")
</pallas_src>

<mosaic_0001>
module attributes {stable_mosaic.version = 11 : i64} {
  func.func @_bert_layer_kernel(%arg0: i32, %arg1: memref<16x32xf32, #tpu.memory_space<vmem>>, %arg2: memref<16x16xf32, #tpu.memory_space<vmem>>, %arg3: memref<1x32xf32, #tpu.memory_space<vmem>>, %arg4: memref<1x32xf32, #tpu.memory_space<vmem>>, %arg5: memref<1x32x128xbf16, #tpu.memory_space<vmem>>, %arg6: memref<1x1x128xf32, #tpu.memory_space<vmem>>, %arg7: memref<1x32x32xbf16, #tpu.memory_space<vmem>>, %arg8: memref<1x1x32xf32, #tpu.memory_space<vmem>>, %arg9: memref<1x1x32xf32, #tpu.memory_space<vmem>>, %arg10: memref<1x1x32xf32, #tpu.memory_space<vmem>>, %arg11: memref<1x32x128xbf16, #tpu.memory_space<vmem>>, %arg12: memref<1x1x128xf32, #tpu.memory_space<vmem>>, %arg13: memref<1x128x32xbf16, #tpu.memory_space<vmem>>, %arg14: memref<1x1x32xf32, #tpu.memory_space<vmem>>, %arg15: memref<1x1x32xf32, #tpu.memory_space<vmem>>, %arg16: memref<1x1x32xf32, #tpu.memory_space<vmem>>, %arg17: memref<32x32xbf16, #tpu.memory_space<vmem>>, %arg18: memref<1x32xf32, #tpu.memory_space<vmem>>, %arg19: memref<32x128xbf16, #tpu.memory_space<vmem>>, %arg20: memref<1x128xf32, #tpu.memory_space<vmem>>, %arg21: memref<2x128xf32, #tpu.memory_space<vmem>>, %arg22: memref<16x32xf32, #tpu.memory_space<vmem>>) attributes {dimension_semantics = [#tpu.dimension_semantics<arbitrary>], iteration_bounds = array<i64: 2>, scalar_prefetch = 0 : i64, scratch_operands = 1 : i64, tpu.core_type = #tpu.core_type<tc>, window_params = [{pipeline_mode = #tpu.pipeline_mode<synchronous>, transform_indices = @transform_0, window_bounds = array<i64: 16, 32>}, {pipeline_mode = #tpu.pipeline_mode<synchronous>, transform_indices = @transform_1, window_bounds = array<i64: 16, 16>}, {pipeline_mode = #tpu.pipeline_mode<synchronous>, transform_indices = @transform_2, window_bounds = array<i64: 1, 32>}, {pipeline_mode = #tpu.pipeline_mode<synchronous>, transform_indices = @transform_3, window_bounds = array<i64: 1, 32>}, {transform_indices = @transform_4, window_bounds = array<i64: 1, 32, 128>}, {transform_indices = @transform_5, window_bounds = array<i64: 1, 1, 128>}, {transform_indices = @transform_6, window_bounds = array<i64: 1, 32, 32>}, {transform_indices = @transform_7, window_bounds = array<i64: 1, 1, 32>}, {transform_indices = @transform_8, window_bounds = array<i64: 1, 1, 32>}, {transform_indices = @transform_9, window_bounds = array<i64: 1, 1, 32>}, {transform_indices = @transform_10, window_bounds = array<i64: 1, 32, 128>}, {transform_indices = @transform_11, window_bounds = array<i64: 1, 1, 128>}, {transform_indices = @transform_12, window_bounds = array<i64: 1, 128, 32>}, {transform_indices = @transform_13, window_bounds = array<i64: 1, 1, 32>}, {transform_indices = @transform_14, window_bounds = array<i64: 1, 1, 32>}, {transform_indices = @transform_15, window_bounds = array<i64: 1, 1, 32>}, {pipeline_mode = #tpu.pipeline_mode<synchronous>, transform_indices = @transform_16, window_bounds = array<i64: 32, 32>}, {pipeline_mode = #tpu.pipeline_mode<synchronous>, transform_indices = @transform_17, window_bounds = array<i64: 1, 32>}, {pipeline_mode = #tpu.pipeline_mode<synchronous>, transform_indices = @transform_18, window_bounds = array<i64: 32, 128>}, {pipeline_mode = #tpu.pipeline_mode<synchronous>, transform_indices = @transform_19, window_bounds = array<i64: 1, 128>}, {pipeline_mode = #tpu.pipeline_mode<synchronous>, transform_indices = @transform_20, window_bounds = array<i64: 2, 128>}]} {
    %c0_i32 = arith.constant 0 : i32
    %0 = arith.cmpi eq, %arg0, %c0_i32 : i32
    %1 = arith.extui %0 : i1 to i32
    %c0_i32_0 = arith.constant 0 : i32
    %2 = arith.cmpi ne, %1, %c0_i32_0 : i32
    scf.if %2 {
      %c0_70 = arith.constant 0 : index
      %c0_71 = arith.constant 0 : index
      %153 = vector.load %arg1[%c0_70, %c0_71] : memref<16x32xf32, #tpu.memory_space<vmem>>, vector<16x32xf32>
      %c0_72 = arith.constant 0 : index
      %c0_73 = arith.constant 0 : index
      %154 = vector.load %arg3[%c0_72, %c0_73] : memref<1x32xf32, #tpu.memory_space<vmem>>, vector<1x32xf32>
      %c0_74 = arith.constant 0 : index
      %c0_75 = arith.constant 0 : index
      %155 = vector.load %arg4[%c0_74, %c0_75] : memref<1x32xf32, #tpu.memory_space<vmem>>, vector<1x32xf32>
      %cst_76 = arith.constant dense<0.000000e+00> : vector<16xf32>
      %156 = vector.multi_reduction <add>, %153, %cst_76 [1] : vector<16x32xf32> to vector<16xf32>
      %157 = vector.shape_cast %156 : vector<16xf32> to vector<16x1xf32>
      %cst_77 = arith.constant 3.200000e+01 : f32
      %158 = vector.broadcast %cst_77 : f32 to vector<16x1xf32>
      %159 = arith.divf %157, %158 : vector<16x1xf32>
      %160 = vector.broadcast %159 : vector<16x1xf32> to vector<16x32xf32>
      %161 = arith.subf %153, %160 : vector<16x32xf32>
      %162 = arith.mulf %161, %161 : vector<16x32xf32>
      %cst_78 = arith.constant dense<0.000000e+00> : vector<16xf32>
      %163 = vector.multi_reduction <add>, %162, %cst_78 [1] : vector<16x32xf32> to vector<16xf32>
      %164 = vector.shape_cast %163 : vector<16xf32> to vector<16x1xf32>
      %cst_79 = arith.constant 3.200000e+01 : f32
      %165 = vector.broadcast %cst_79 : f32 to vector<16x1xf32>
      %166 = arith.divf %164, %165 : vector<16x1xf32>
      %167 = vector.broadcast %159 : vector<16x1xf32> to vector<16x32xf32>
      %168 = arith.subf %153, %167 : vector<16x32xf32>
      %cst_80 = arith.constant 9.99999996E-13 : f32
      %169 = vector.broadcast %cst_80 : f32 to vector<16x1xf32>
      %170 = arith.addf %166, %169 : vector<16x1xf32>
      %171 = math.rsqrt %170 : vector<16x1xf32>
      %172 = vector.broadcast %171 : vector<16x1xf32> to vector<16x32xf32>
      %173 = arith.mulf %168, %172 : vector<16x32xf32>
      %174 = vector.broadcast %154 : vector<1x32xf32> to vector<16x32xf32>
      %175 = arith.mulf %173, %174 : vector<16x32xf32>
      %176 = vector.broadcast %155 : vector<1x32xf32> to vector<16x32xf32>
      %177 = arith.addf %175, %176 : vector<16x32xf32>
      %c0_81 = arith.constant 0 : index
      %c0_82 = arith.constant 0 : index
      %178 = vector.load %arg22[%c0_81, %c0_82] : memref<16x32xf32, #tpu.memory_space<vmem>>, vector<16x32xf32>
      tpu.vector_store %arg22[%c0_81, %c0_82], %177 {strides = array<i32>} : memref<16x32xf32, #tpu.memory_space<vmem>>, vector<16x32xf32>,
    } else {
    }
    %c0 = arith.constant 0 : index
    %c0_1 = arith.constant 0 : index
    %3 = vector.load %arg22[%c0, %c0_1] : memref<16x32xf32, #tpu.memory_space<vmem>>, vector<16x32xf32>
    %c0_2 = arith.constant 0 : index
    %c0_3 = arith.constant 0 : index
    %4 = vector.load %arg2[%c0_2, %c0_3] : memref<16x16xf32, #tpu.memory_space<vmem>>, vector<16x16xf32>
    %5 = arith.truncf %3 : vector<16x32xf32> to vector<16x32xbf16>
    %c0_4 = arith.constant 0 : index
    %c0_5 = arith.constant 0 : index
    %c0_6 = arith.constant 0 : index
    %6 = vector.load %arg5[%c0_4, %c0_5, %c0_6] : memref<1x32x128xbf16, #tpu.memory_space<vmem>>, vector<1x32x128xbf16>
    %7 = vector.shape_cast %6 : vector<1x32x128xbf16> to vector<32x128xbf16>
    %cst = arith.constant dense<0.000000e+00> : vector<16x128xf32>
    %8 = tpu.matmul %5, %7, %cst {dimension_numbers = #tpu.dot_dimension_numbers<[1], [0], [0], [1], [0, 0, 1, 1], [], []>} : vector<16x32xbf16>, vector<32x128xbf16>, vector<16x128xf32> -> vector<16x128xf32>
    %c0_7 = arith.constant 0 : index
    %c0_8 = arith.constant 0 : index
    %c0_9 = arith.constant 0 : index
    %9 = vector.load %arg6[%c0_7, %c0_8, %c0_9] : memref<1x1x128xf32, #tpu.memory_space<vmem>>, vector<1x1x128xf32>
    %10 = vector.shape_cast %9 : vector<1x1x128xf32> to vector<1x128xf32>
    %11 = vector.broadcast %10 : vector<1x128xf32> to vector<16x128xf32>
    %12 = arith.addf %8, %11 : vector<16x128xf32>
    %13 = vector.extract_strided_slice %12 {offsets = [0, 0], sizes = [16, 16], strides = [1, 1]} : vector<16x128xf32> to vector<16x16xf32>
    %14 = arith.truncf %13 : vector<16x16xf32> to vector<16x16xbf16>
    %15 = vector.extract_strided_slice %12 {offsets = [0, 32], sizes = [16, 16], strides = [1, 1]} : vector<16x128xf32> to vector<16x16xf32>
    %16 = arith.truncf %15 : vector<16x16xf32> to vector<16x16xbf16>
    %17 = vector.extract_strided_slice %12 {offsets = [0, 64], sizes = [16, 16], strides = [1, 1]} : vector<16x128xf32> to vector<16x16xf32>
    %18 = arith.truncf %17 : vector<16x16xf32> to vector<16x16xbf16>
    %cst_10 = arith.constant dense<0.000000e+00> : vector<16x16xf32>
    %19 = tpu.matmul %14, %16, %cst_10 {dimension_numbers = #tpu.dot_dimension_numbers<[1], [1], [0], [0], [0, 0, 1, 0], [], []>} : vector<16x16xbf16>, vector<16x16xbf16>, vector<16x16xf32> -> vector<16x16xf32>
    %cst_11 = arith.constant 2.500000e-01 : f32
    %20 = vector.broadcast %cst_11 : f32 to vector<16x16xf32>
    %21 = arith.mulf %19, %20 : vector<16x16xf32>
    %22 = arith.addf %21, %4 : vector<16x16xf32>
    %cst_12 = arith.constant dense<0xFF800000> : vector<16xf32>
    %23 = vector.multi_reduction <maximumf>, %22, %cst_12 [1] : vector<16x16xf32> to vector<16xf32>
    %24 = vector.shape_cast %23 : vector<16xf32> to vector<16x1xf32>
    %25 = vector.broadcast %24 : vector<16x1xf32> to vector<16x16xf32>
    %26 = arith.subf %22, %25 : vector<16x16xf32>
    %27 = math.exp %26 : vector<16x16xf32>
    %cst_13 = arith.constant dense<0.000000e+00> : vector<16xf32>
    %28 = vector.multi_reduction <add>, %27, %cst_13 [1] : vector<16x16xf32> to vector<16xf32>
    %29 = vector.shape_cast %28 : vector<16xf32> to vector<16x1xf32>
    %30 = tpu.reciprocal %29 {approx = true} : vector<16x1xf32> -> vector<16x1xf32>
    %31 = vector.broadcast %30 : vector<16x1xf32> to vector<16x16xf32>
    %32 = arith.mulf %27, %31 : vector<16x16xf32>
    %33 = arith.truncf %32 : vector<16x16xf32> to vector<16x16xbf16>
    %cst_14 = arith.constant dense<0.000000e+00> : vector<16x16xf32>
    %34 = tpu.matmul %33, %18, %cst_14 {dimension_numbers = #tpu.dot_dimension_numbers<[1], [0], [0], [1], [0, 0, 1, 1], [], []>} : vector<16x16xbf16>, vector<16x16xbf16>, vector<16x16xf32> -> vector<16x16xf32>
    %35 = vector.extract_strided_slice %12 {offsets = [0, 16], sizes = [16, 16], strides = [1, 1]} : vector<16x128xf32> to vector<16x16xf32>
    %36 = arith.truncf %35 : vector<16x16xf32> to vector<16x16xbf16>
    %37 = vector.extract_strided_slice %12 {offsets = [0, 48], sizes = [16, 16], strides = [1, 1]} : vector<16x128xf32> to vector<16x16xf32>
    %38 = arith.truncf %37 : vector<16x16xf32> to vector<16x16xbf16>
    %39 = vector.extract_strided_slice %12 {offsets = [0, 80], sizes = [16, 16], strides = [1, 1]} : vector<16x128xf32> to vector<16x16xf32>
    %40 = arith.truncf %39 : vector<16x16xf32> to vector<16x16xbf16>
    %cst_15 = arith.constant dense<0.000000e+00> : vector<16x16xf32>
    %41 = tpu.matmul %36, %38, %cst_15 {dimension_numbers = #tpu.dot_dimension_numbers<[1], [1], [0], [0], [0, 0, 1, 0], [], []>} : vector<16x16xbf16>, vector<16x16xbf16>, vector<16x16xf32> -> vector<16x16xf32>
    %cst_16 = arith.constant 2.500000e-01 : f32
    %42 = vector.broadcast %cst_16 : f32 to vector<16x16xf32>
    %43 = arith.mulf %41, %42 : vector<16x16xf32>
    %44 = arith.addf %43, %4 : vector<16x16xf32>
    %cst_17 = arith.constant dense<0xFF800000> : vector<16xf32>
    %45 = vector.multi_reduction <maximumf>, %44, %cst_17 [1] : vector<16x16xf32> to vector<16xf32>
    %46 = vector.shape_cast %45 : vector<16xf32> to vector<16x1xf32>
    %47 = vector.broadcast %46 : vector<16x1xf32> to vector<16x16xf32>
    %48 = arith.subf %44, %47 : vector<16x16xf32>
    %49 = math.exp %48 : vector<16x16xf32>
    %cst_18 = arith.constant dense<0.000000e+00> : vector<16xf32>
    %50 = vector.multi_reduction <add>, %49, %cst_18 [1] : vector<16x16xf32> to vector<16xf32>
    %51 = vector.shape_cast %50 : vector<16xf32> to vector<16x1xf32>
    %52 = tpu.reciprocal %51 {approx = true} : vector<16x1xf32> -> vector<16x1xf32>
    %53 = vector.broadcast %52 : vector<16x1xf32> to vector<16x16xf32>
    %54 = arith.mulf %49, %53 : vector<16x16xf32>
    %55 = arith.truncf %54 : vector<16x16xf32> to vector<16x16xbf16>
    %cst_19 = arith.constant dense<0.000000e+00> : vector<16x16xf32>
    %56 = tpu.matmul %55, %40, %cst_19 {dimension_numbers = #tpu.dot_dimension_numbers<[1], [0], [0], [1], [0, 0, 1, 1], [], []>} : vector<16x16xbf16>, vector<16x16xbf16>, vector<16x16xf32> -> vector<16x16xf32>
    %57 = tpu.concatenate %34, %56 in 1 : vector<16x16xf32>, vector<16x16xf32> -> vector<16x32xf32>
    %58 = arith.truncf %57 : vector<16x32xf32> to vector<16x32xbf16>
    %c0_20 = arith.constant 0 : index
    %c0_21 = arith.constant 0 : index
    %c0_22 = arith.constant 0 : index
    %59 = vector.load %arg7[%c0_20, %c0_21, %c0_22] : memref<1x32x32xbf16, #tpu.memory_space<vmem>>, vector<1x32x32xbf16>
    %60 = vector.shape_cast %59 : vector<1x32x32xbf16> to vector<32x32xbf16>
    %cst_23 = arith.constant dense<0.000000e+00> : vector<16x32xf32>
    %61 = tpu.matmul %58, %60, %cst_23 {dimension_numbers = #tpu.dot_dimension_numbers<[1], [0], [0], [1], [0, 0, 1, 1], [], []>} : vector<16x32xbf16>, vector<32x32xbf16>, vector<16x32xf32> -> vector<16x32xf32>
    %c0_24 = arith.constant 0 : index
    %c0_25 = arith.constant 0 : index
    %c0_26 = arith.constant 0 : index
    %62 = vector.load %arg8[%c0_24, %c0_25, %c0_26] : memref<1x1x32xf32, #tpu.memory_space<vmem>>, vector<1x1x32xf32>
    %63 = vector.shape_cast %62 : vector<1x1x32xf32> to vector<1x32xf32>
    %64 = vector.broadcast %63 : vector<1x32xf32> to vector<16x32xf32>
    %65 = arith.addf %61, %64 : vector<16x32xf32>
    %66 = arith.addf %65, %3 : vector<16x32xf32>
    %c0_27 = arith.constant 0 : index
    %c0_28 = arith.constant 0 : index
    %c0_29 = arith.constant 0 : index
    %67 = vector.load %arg9[%c0_27, %c0_28, %c0_29] : memref<1x1x32xf32, #tpu.memory_space<vmem>>, vector<1x1x32xf32>
    %68 = vector.shape_cast %67 : vector<1x1x32xf32> to vector<1x32xf32>
    %c0_30 = arith.constant 0 : index
    %c0_31 = arith.constant 0 : index
    %c0_32 = arith.constant 0 : index
    %69 = vector.load %arg10[%c0_30, %c0_31, %c0_32] : memref<1x1x32xf32, #tpu.memory_space<vmem>>, vector<1x1x32xf32>
    %70 = vector.shape_cast %69 : vector<1x1x32xf32> to vector<1x32xf32>
    %cst_33 = arith.constant dense<0.000000e+00> : vector<16xf32>
    %71 = vector.multi_reduction <add>, %66, %cst_33 [1] : vector<16x32xf32> to vector<16xf32>
    %72 = vector.shape_cast %71 : vector<16xf32> to vector<16x1xf32>
    %cst_34 = arith.constant 3.200000e+01 : f32
    %73 = vector.broadcast %cst_34 : f32 to vector<16x1xf32>
    %74 = arith.divf %72, %73 : vector<16x1xf32>
    %75 = vector.broadcast %74 : vector<16x1xf32> to vector<16x32xf32>
    %76 = arith.subf %66, %75 : vector<16x32xf32>
    %77 = arith.mulf %76, %76 : vector<16x32xf32>
    %cst_35 = arith.constant dense<0.000000e+00> : vector<16xf32>
    %78 = vector.multi_reduction <add>, %77, %cst_35 [1] : vector<16x32xf32> to vector<16xf32>
    %79 = vector.shape_cast %78 : vector<16xf32> to vector<16x1xf32>
    %cst_36 = arith.constant 3.200000e+01 : f32
    %80 = vector.broadcast %cst_36 : f32 to vector<16x1xf32>
    %81 = arith.divf %79, %80 : vector<16x1xf32>
    %82 = vector.broadcast %74 : vector<16x1xf32> to vector<16x32xf32>
    %83 = arith.subf %66, %82 : vector<16x32xf32>
    %cst_37 = arith.constant 9.99999996E-13 : f32
    %84 = vector.broadcast %cst_37 : f32 to vector<16x1xf32>
    %85 = arith.addf %81, %84 : vector<16x1xf32>
    %86 = math.rsqrt %85 : vector<16x1xf32>
    %87 = vector.broadcast %86 : vector<16x1xf32> to vector<16x32xf32>
    %88 = arith.mulf %83, %87 : vector<16x32xf32>
    %89 = vector.broadcast %68 : vector<1x32xf32> to vector<16x32xf32>
    %90 = arith.mulf %88, %89 : vector<16x32xf32>
    %91 = vector.broadcast %70 : vector<1x32xf32> to vector<16x32xf32>
    %92 = arith.addf %90, %91 : vector<16x32xf32>
    %93 = arith.truncf %92 : vector<16x32xf32> to vector<16x32xbf16>
    %c0_38 = arith.constant 0 : index
    %c0_39 = arith.constant 0 : index
    %c0_40 = arith.constant 0 : index
    %94 = vector.load %arg11[%c0_38, %c0_39, %c0_40] : memref<1x32x128xbf16, #tpu.memory_space<vmem>>, vector<1x32x128xbf16>
    %95 = vector.shape_cast %94 : vector<1x32x128xbf16> to vector<32x128xbf16>
    %cst_41 = arith.constant dense<0.000000e+00> : vector<16x128xf32>
    %96 = tpu.matmul %93, %95, %cst_41 {dimension_numbers = #tpu.dot_dimension_numbers<[1], [0], [0], [1], [0, 0, 1, 1], [], []>} : vector<16x32xbf16>, vector<32x128xbf16>, vector<16x128xf32> -> vector<16x128xf32>
    %c0_42 = arith.constant 0 : index
    %c0_43 = arith.constant 0 : index
    %c0_44 = arith.constant 0 : index
    %97 = vector.load %arg12[%c0_42, %c0_43, %c0_44] : memref<1x1x128xf32, #tpu.memory_space<vmem>>, vector<1x1x128xf32>
    %98 = vector.shape_cast %97 : vector<1x1x128xf32> to vector<1x128xf32>
    %99 = vector.broadcast %98 : vector<1x128xf32> to vector<16x128xf32>
    %100 = arith.addf %96, %99 : vector<16x128xf32>
    %101 = arith.mulf %100, %100 : vector<16x128xf32>
    %102 = arith.mulf %100, %101 : vector<16x128xf32>
    %cst_45 = arith.constant 4.471500e-02 : f32
    %103 = vector.broadcast %cst_45 : f32 to vector<16x128xf32>
    %104 = arith.mulf %103, %102 : vector<16x128xf32>
    %105 = arith.addf %100, %104 : vector<16x128xf32>
    %cst_46 = arith.constant 0.797884583 : f32
    %106 = vector.broadcast %cst_46 : f32 to vector<16x128xf32>
    %107 = arith.mulf %106, %105 : vector<16x128xf32>
    %108 = math.tanh %107 : vector<16x128xf32>
    %cst_47 = arith.constant 1.000000e+00 : f32
    %109 = vector.broadcast %cst_47 : f32 to vector<16x128xf32>
    %110 = arith.addf %109, %108 : vector<16x128xf32>
    %cst_48 = arith.constant 5.000000e-01 : f32
    %111 = vector.broadcast %cst_48 : f32 to vector<16x128xf32>
    %112 = arith.mulf %111, %110 : vector<16x128xf32>
    %113 = arith.mulf %100, %112 : vector<16x128xf32>
    %114 = arith.truncf %113 : vector<16x128xf32> to vector<16x128xbf16>
    %c0_49 = arith.constant 0 : index
    %c0_50 = arith.constant 0 : index
    %c0_51 = arith.constant 0 : index
    %115 = vector.load %arg13[%c0_49, %c0_50, %c0_51] : memref<1x128x32xbf16, #tpu.memory_space<vmem>>, vector<1x128x32xbf16>
    %116 = vector.shape_cast %115 : vector<1x128x32xbf16> to vector<128x32xbf16>
    %cst_52 = arith.constant dense<0.000000e+00> : vector<16x32xf32>
    %117 = tpu.matmul %114, %116, %cst_52 {dimension_numbers = #tpu.dot_dimension_numbers<[1], [0], [0], [1], [0, 0, 1, 1], [], []>} : vector<16x128xbf16>, vector<128x32xbf16>, vector<16x32xf32> -> vector<16x32xf32>
    %c0_53 = arith.constant 0 : index
    %c0_54 = arith.constant 0 : index
    %c0_55 = arith.constant 0 : index
    %118 = vector.load %arg14[%c0_53, %c0_54, %c0_55] : memref<1x1x32xf32, #tpu.memory_space<vmem>>, vector<1x1x32xf32>
    %119 = vector.shape_cast %118 : vector<1x1x32xf32> to vector<1x32xf32>
    %120 = vector.broadcast %119 : vector<1x32xf32> to vector<16x32xf32>
    %121 = arith.addf %117, %120 : vector<16x32xf32>
    %122 = arith.addf %121, %92 : vector<16x32xf32>
    %c0_56 = arith.constant 0 : index
    %c0_57 = arith.constant 0 : index
    %c0_58 = arith.constant 0 : index
    %123 = vector.load %arg15[%c0_56, %c0_57, %c0_58] : memref<1x1x32xf32, #tpu.memory_space<vmem>>, vector<1x1x32xf32>
    %124 = vector.shape_cast %123 : vector<1x1x32xf32> to vector<1x32xf32>
    %c0_59 = arith.constant 0 : index
    %c0_60 = arith.constant 0 : index
    %c0_61 = arith.constant 0 : index
    %125 = vector.load %arg16[%c0_59, %c0_60, %c0_61] : memref<1x1x32xf32, #tpu.memory_space<vmem>>, vector<1x1x32xf32>
    %126 = vector.shape_cast %125 : vector<1x1x32xf32> to vector<1x32xf32>
    %cst_62 = arith.constant dense<0.000000e+00> : vector<16xf32>
    %127 = vector.multi_reduction <add>, %122, %cst_62 [1] : vector<16x32xf32> to vector<16xf32>
    %128 = vector.shape_cast %127 : vector<16xf32> to vector<16x1xf32>
    %cst_63 = arith.constant 3.200000e+01 : f32
    %129 = vector.broadcast %cst_63 : f32 to vector<16x1xf32>
    %130 = arith.divf %128, %129 : vector<16x1xf32>
    %131 = vector.broadcast %130 : vector<16x1xf32> to vector<16x32xf32>
    %132 = arith.subf %122, %131 : vector<16x32xf32>
    %133 = arith.mulf %132, %132 : vector<16x32xf32>
    %cst_64 = arith.constant dense<0.000000e+00> : vector<16xf32>
    %134 = vector.multi_reduction <add>, %133, %cst_64 [1] : vector<16x32xf32> to vector<16xf32>
    %135 = vector.shape_cast %134 : vector<16xf32> to vector<16x1xf32>
    %cst_65 = arith.constant 3.200000e+01 : f32
    %136 = vector.broadcast %cst_65 : f32 to vector<16x1xf32>
    %137 = arith.divf %135, %136 : vector<16x1xf32>
    %138 = vector.broadcast %130 : vector<16x1xf32> to vector<16x32xf32>
    %139 = arith.subf %122, %138 : vector<16x32xf32>
    %cst_66 = arith.constant 9.99999996E-13 : f32
    %140 = vector.broadcast %cst_66 : f32 to vector<16x1xf32>
    %141 = arith.addf %137, %140 : vector<16x1xf32>
    %142 = math.rsqrt %141 : vector<16x1xf32>
    %143 = vector.broadcast %142 : vector<16x1xf32> to vector<16x32xf32>
    %144 = arith.mulf %139, %143 : vector<16x32xf32>
    %145 = vector.broadcast %124 : vector<1x32xf32> to vector<16x32xf32>
    %146 = arith.mulf %144, %145 : vector<16x32xf32>
    %147 = vector.broadcast %126 : vector<1x32xf32> to vector<16x32xf32>
    %148 = arith.addf %146, %147 : vector<16x32xf32>
    %c0_67 = arith.constant 0 : index
    %c0_68 = arith.constant 0 : index
    %149 = vector.load %arg22[%c0_67, %c0_68] : memref<16x32xf32, #tpu.memory_space<vmem>>, vector<16x32xf32>
    tpu.vector_store %arg22[%c0_67, %c0_68], %148 {strides = array<i32>} : memref<16x32xf32, #tpu.memory_space<vmem>>, vector<16x32xf32>,
    %c1_i32 = arith.constant 1 : i32
    %150 = arith.cmpi eq, %arg0, %c1_i32 : i32
    %151 = arith.extui %150 : i1 to i32
    %c0_i32_69 = arith.constant 0 : i32
    %152 = arith.cmpi ne, %151, %c0_i32_69 : i32
    scf.if %152 {
      %153 = vector.extract_strided_slice %148 {offsets = [0, 0], sizes = [1, 32], strides = [1, 1]} : vector<16x32xf32> to vector<1x32xf32>
      %154 = vector.extract_strided_slice %148 {offsets = [8, 0], sizes = [1, 32], strides = [1, 1]} : vector<16x32xf32> to vector<1x32xf32>
      %155 = tpu.concatenate %153, %154 in 0 : vector<1x32xf32>, vector<1x32xf32> -> vector<2x32xf32>
      %156 = arith.truncf %155 : vector<2x32xf32> to vector<2x32xbf16>
      %c0_70 = arith.constant 0 : index
      %c0_71 = arith.constant 0 : index
      %157 = vector.load %arg17[%c0_70, %c0_71] : memref<32x32xbf16, #tpu.memory_space<vmem>>, vector<32x32xbf16>
      %cst_72 = arith.constant dense<0.000000e+00> : vector<2x32xf32>
      %158 = tpu.matmul %156, %157, %cst_72 {dimension_numbers = #tpu.dot_dimension_numbers<[1], [0], [0], [1], [0, 0, 1, 1], [], []>} : vector<2x32xbf16>, vector<32x32xbf16>, vector<2x32xf32> -> vector<2x32xf32>
      %c0_73 = arith.constant 0 : index
      %c0_74 = arith.constant 0 : index
      %159 = vector.load %arg18[%c0_73, %c0_74] : memref<1x32xf32, #tpu.memory_space<vmem>>, vector<1x32xf32>
      %160 = vector.broadcast %159 : vector<1x32xf32> to vector<2x32xf32>
      %161 = arith.addf %158, %160 : vector<2x32xf32>
      %162 = math.tanh %161 : vector<2x32xf32>
      %163 = arith.truncf %162 : vector<2x32xf32> to vector<2x32xbf16>
      %c0_75 = arith.constant 0 : index
      %c0_76 = arith.constant 0 : index
      %164 = vector.load %arg19[%c0_75, %c0_76] : memref<32x128xbf16, #tpu.memory_space<vmem>>, vector<32x128xbf16>
      %cst_77 = arith.constant dense<0.000000e+00> : vector<2x128xf32>
      %165 = tpu.matmul %163, %164, %cst_77 {dimension_numbers = #tpu.dot_dimension_numbers<[1], [0], [0], [1], [0, 0, 1, 1], [], []>} : vector<2x32xbf16>, vector<32x128xbf16>, vector<2x128xf32> -> vector<2x128xf32>
      %c0_78 = arith.constant 0 : index
      %c0_79 = arith.constant 0 : index
      %166 = vector.load %arg20[%c0_78, %c0_79] : memref<1x128xf32, #tpu.memory_space<vmem>>, vector<1x128xf32>
      %167 = vector.broadcast %166 : vector<1x128xf32> to vector<2x128xf32>
      %168 = arith.addf %165, %167 : vector<2x128xf32>
      %c0_80 = arith.constant 0 : index
      %c0_81 = arith.constant 0 : index
      %169 = vector.load %arg21[%c0_80, %c0_81] : memref<2x128xf32, #tpu.memory_space<vmem>>, vector<2x128xf32>
      tpu.vector_store %arg21[%c0_80, %c0_81], %168 {strides = array<i32>} : memref<2x128xf32, #tpu.memory_space<vmem>>, vector<2x128xf32>,
    } else {
    }
    return
  }
  func.func @transform_0(%arg0: i32) -> (i32, i32) {
    %c0_i32 = arith.constant 0 : i32
    %c0_i32_0 = arith.constant 0 : i32
    %c0_i32_1 = arith.constant 0 : i32
    return %c0_i32, %c0_i32_0 : i32, i32
  }
  func.func @transform_1(%arg0: i32) -> (i32, i32) {
    %c0_i32 = arith.constant 0 : i32
    %c0_i32_0 = arith.constant 0 : i32
    %c0_i32_1 = arith.constant 0 : i32
    return %c0_i32, %c0_i32_0 : i32, i32
  }
  func.func @transform_2(%arg0: i32) -> (i32, i32) {
    %c0_i32 = arith.constant 0 : i32
    %c0_i32_0 = arith.constant 0 : i32
    %c0_i32_1 = arith.constant 0 : i32
    return %c0_i32, %c0_i32_0 : i32, i32
  }
  func.func @transform_3(%arg0: i32) -> (i32, i32) {
    %c0_i32 = arith.constant 0 : i32
    %c0_i32_0 = arith.constant 0 : i32
    %c0_i32_1 = arith.constant 0 : i32
    return %c0_i32, %c0_i32_0 : i32, i32
  }
  func.func @transform_4(%arg0: i32) -> (i32, i32, i32) {
    %c0_i32 = arith.constant 0 : i32
    %c0_i32_0 = arith.constant 0 : i32
    %c0_i32_1 = arith.constant 0 : i32
    return %arg0, %c0_i32, %c0_i32_0 : i32, i32, i32
  }
  func.func @transform_5(%arg0: i32) -> (i32, i32, i32) {
    %c0_i32 = arith.constant 0 : i32
    %c0_i32_0 = arith.constant 0 : i32
    %c0_i32_1 = arith.constant 0 : i32
    return %arg0, %c0_i32, %c0_i32_0 : i32, i32, i32
  }
  func.func @transform_6(%arg0: i32) -> (i32, i32, i32) {
    %c0_i32 = arith.constant 0 : i32
    %c0_i32_0 = arith.constant 0 : i32
    %c0_i32_1 = arith.constant 0 : i32
    return %arg0, %c0_i32, %c0_i32_0 : i32, i32, i32
  }
  func.func @transform_7(%arg0: i32) -> (i32, i32, i32) {
    %c0_i32 = arith.constant 0 : i32
    %c0_i32_0 = arith.constant 0 : i32
    %c0_i32_1 = arith.constant 0 : i32
    return %arg0, %c0_i32, %c0_i32_0 : i32, i32, i32
  }
  func.func @transform_8(%arg0: i32) -> (i32, i32, i32) {
    %c0_i32 = arith.constant 0 : i32
    %c0_i32_0 = arith.constant 0 : i32
    %c0_i32_1 = arith.constant 0 : i32
    return %arg0, %c0_i32, %c0_i32_0 : i32, i32, i32
  }
  func.func @transform_9(%arg0: i32) -> (i32, i32, i32) {
    %c0_i32 = arith.constant 0 : i32
    %c0_i32_0 = arith.constant 0 : i32
    %c0_i32_1 = arith.constant 0 : i32
    return %arg0, %c0_i32, %c0_i32_0 : i32, i32, i32
  }
  func.func @transform_10(%arg0: i32) -> (i32, i32, i32) {
    %c0_i32 = arith.constant 0 : i32
    %c0_i32_0 = arith.constant 0 : i32
    %c0_i32_1 = arith.constant 0 : i32
    return %arg0, %c0_i32, %c0_i32_0 : i32, i32, i32
  }
  func.func @transform_11(%arg0: i32) -> (i32, i32, i32) {
    %c0_i32 = arith.constant 0 : i32
    %c0_i32_0 = arith.constant 0 : i32
    %c0_i32_1 = arith.constant 0 : i32
    return %arg0, %c0_i32, %c0_i32_0 : i32, i32, i32
  }
  func.func @transform_12(%arg0: i32) -> (i32, i32, i32) {
    %c0_i32 = arith.constant 0 : i32
    %c0_i32_0 = arith.constant 0 : i32
    %c0_i32_1 = arith.constant 0 : i32
    return %arg0, %c0_i32, %c0_i32_0 : i32, i32, i32
  }
  func.func @transform_13(%arg0: i32) -> (i32, i32, i32) {
    %c0_i32 = arith.constant 0 : i32
    %c0_i32_0 = arith.constant 0 : i32
    %c0_i32_1 = arith.constant 0 : i32
    return %arg0, %c0_i32, %c0_i32_0 : i32, i32, i32
  }
  func.func @transform_14(%arg0: i32) -> (i32, i32, i32) {
    %c0_i32 = arith.constant 0 : i32
    %c0_i32_0 = arith.constant 0 : i32
    %c0_i32_1 = arith.constant 0 : i32
    return %arg0, %c0_i32, %c0_i32_0 : i32, i32, i32
  }
  func.func @transform_15(%arg0: i32) -> (i32, i32, i32) {
    %c0_i32 = arith.constant 0 : i32
    %c0_i32_0 = arith.constant 0 : i32
    %c0_i32_1 = arith.constant 0 : i32
    return %arg0, %c0_i32, %c0_i32_0 : i32, i32, i32
  }
  func.func @transform_16(%arg0: i32) -> (i32, i32) {
    %c0_i32 = arith.constant 0 : i32
    %c0_i32_0 = arith.constant 0 : i32
    %c0_i32_1 = arith.constant 0 : i32
    return %c0_i32, %c0_i32_0 : i32, i32
  }
  func.func @transform_17(%arg0: i32) -> (i32, i32) {
    %c0_i32 = arith.constant 0 : i32
    %c0_i32_0 = arith.constant 0 : i32
    %c0_i32_1 = arith.constant 0 : i32
    return %c0_i32, %c0_i32_0 : i32, i32
  }
  func.func @transform_18(%arg0: i32) -> (i32, i32) {
    %c0_i32 = arith.constant 0 : i32
    %c0_i32_0 = arith.constant 0 : i32
    %c0_i32_1 = arith.constant 0 : i32
    return %c0_i32, %c0_i32_0 : i32, i32
  }
  func.func @transform_19(%arg0: i32) -> (i32, i32) {
    %c0_i32 = arith.constant 0 : i32
    %c0_i32_0 = arith.constant 0 : i32
    %c0_i32_1 = arith.constant 0 : i32
    return %c0_i32, %c0_i32_0 : i32, i32
  }
  func.func @transform_20(%arg0: i32) -> (i32, i32) {
    %c0_i32 = arith.constant 0 : i32
    %c0_i32_0 = arith.constant 0 : i32
    %c0_i32_1 = arith.constant 0 : i32
    return %c0_i32, %c0_i32_0 : i32, i32
  }
}

</mosaic_0001>

<llo_original>
// kernel: bert_multilabel_forward.1
$region0: #{bert_multilabel_forward.1}
  #allocation0 [shape = 'u32[]', space=smem, size = 0x4, offset = 0x4, fixed_abs, tag = 'smem constant byte address 0x4 - core index']
  #allocation1 [shape = 'u32[144,128]{1,0:T(1,128)}', space=vmem, size = 0x12000, scoped, tag = 'internal scratch']
  #allocation2 [shape = 'f32[16,32]{1,0:T(8,128)}', space=vmem, size = 0x2000, scoped, tag = 'scratch operand']
  %s0 = inlined_call_operand.vmem [shape: f32[16,32], index: 0, kind: input, shape index: {}]
  %s1 = inlined_call_operand.vmem [shape: f32[16,16], index: 1, kind: input, shape index: {}]
  %s2 = inlined_call_operand.vmem [shape: f32[1,32], index: 2, kind: input, shape index: {}]
  %s3 = inlined_call_operand.vmem [shape: f32[1,32], index: 3, kind: input, shape index: {}]
  %s4 = inlined_call_operand.vmem [shape: bf16[2,32,128], index: 4, kind: input, shape index: {}]
  %s5 = inlined_call_operand.vmem [shape: f32[2,1,128], index: 5, kind: input, shape index: {}]
  %s6 = inlined_call_operand.vmem [shape: bf16[2,32,32], index: 6, kind: input, shape index: {}]
  %s7 = inlined_call_operand.vmem [shape: f32[2,1,32], index: 7, kind: input, shape index: {}]
  %s8 = inlined_call_operand.vmem [shape: f32[2,1,32], index: 8, kind: input, shape index: {}]
  %s9 = inlined_call_operand.vmem [shape: f32[2,1,32], index: 9, kind: input, shape index: {}]
  %s10 = inlined_call_operand.vmem [shape: bf16[2,32,128], index: 10, kind: input, shape index: {}]
  %s11 = inlined_call_operand.vmem [shape: f32[2,1,128], index: 11, kind: input, shape index: {}]
  %s12 = inlined_call_operand.vmem [shape: bf16[2,128,32], index: 12, kind: input, shape index: {}]
  %s13 = inlined_call_operand.vmem [shape: f32[2,1,32], index: 13, kind: input, shape index: {}]
  %s14 = inlined_call_operand.vmem [shape: f32[2,1,32], index: 14, kind: input, shape index: {}]
  %s15 = inlined_call_operand.vmem [shape: f32[2,1,32], index: 15, kind: input, shape index: {}]
  %s16 = inlined_call_operand.vmem [shape: bf16[32,32], index: 16, kind: input, shape index: {}]
  %s17 = inlined_call_operand.vmem [shape: f32[1,32], index: 17, kind: input, shape index: {}]
  %s18 = inlined_call_operand.vmem [shape: bf16[32,128], index: 18, kind: input, shape index: {}]
  %s19 = inlined_call_operand.vmem [shape: f32[1,128], index: 19, kind: input, shape index: {}]
  %s20 = inlined_call_operand.vmem [shape: f32[2,128], index: 20, kind: output, shape index: {}]
  %s21 = sld [smem:[#allocation0]]
  $region121: #{bert_multilabel_forward.1} parent=0
    _
  %s23 = ssub.s32 1, %s21
  %s24 = scalar_select 0, %s23, %s21
  loop: start=0, step=1, limit=4
  $region2: #{bert_multilabel_forward.1} parent=0 // loop_pre_header
    _
  $region3: #{bert_multilabel_forward.1} parent=0 // loop_header
    %s26 = sphi 0, %s30
    %p27 = scmp.ge.s32.totalorder %s26, 4
    %s34 = sphi 0, %s34
    %s36 = sphi 0, %s34
    %s37 = sphi 0, %s36
    %s51 = sphi 0, %s37
    %s55 = sphi 0, %s55
    %s57 = sphi 0, %s55
    %s58 = sphi 0, %s57
    %s72 = sphi 0, %s58
    %s76 = sphi 0, %s76
    %s78 = sphi 0, %s76
    %s79 = sphi 0, %s78
    %s93 = sphi 0, %s79
    %s97 = sphi 0, %s97
    %s99 = sphi 0, %s97
    %s100 = sphi 0, %s99
    %s114 = sphi 0, %s100
    %s120 = sphi 0, %s122
    %s123 = sphi 0, %s120
    %s124 = sphi 0, %s123
    %s140 = sphi 0, %s124
    %s146 = sphi 0, %s148
    %s149 = sphi 0, %s146
    %s150 = sphi 0, %s149
    %s166 = sphi 0, %s150
    %s172 = sphi 0, %s174
    %s175 = sphi 0, %s172
    %s176 = sphi 0, %s175
    %s192 = sphi 0, %s176
    %s198 = sphi 0, %s200
    %s201 = sphi 0, %s198
    %s202 = sphi 0, %s201
    %s218 = sphi 0, %s202
    %s224 = sphi 0, %s226
    %s227 = sphi 0, %s224
    %s228 = sphi 0, %s227
    %s244 = sphi 0, %s228
    %s250 = sphi 0, %s252
    %s253 = sphi 0, %s250
    %s254 = sphi 0, %s253
    %s270 = sphi 0, %s254
    %s276 = sphi 0, %s278
    %s279 = sphi 0, %s276
    %s280 = sphi 0, %s279
    %s296 = sphi 0, %s280
    %s302 = sphi 0, %s304
    %s305 = sphi 0, %s302
    %s306 = sphi 0, %s305
    %s322 = sphi 0, %s306
    %s328 = sphi 0, %s330
    %s331 = sphi 0, %s328
    %s332 = sphi 0, %s331
    %s348 = sphi 0, %s332
    %s354 = sphi 0, %s356
    %s357 = sphi 0, %s354
    %s358 = sphi 0, %s357
    %s374 = sphi 0, %s358
    %s380 = sphi 0, %s382
    %s383 = sphi 0, %s380
    %s384 = sphi 0, %s383
    %s400 = sphi 0, %s384
    %s406 = sphi 0, %s408
    %s409 = sphi 0, %s406
    %s410 = sphi 0, %s409
    %s426 = sphi 0, %s410
    %s430 = sphi 0, %s430
    %s432 = sphi 0, %s430
    %s433 = sphi 0, %s432
    %s447 = sphi 0, %s433
    %s451 = sphi 0, %s451
    %s453 = sphi 0, %s451
    %s454 = sphi 0, %s453
    %s468 = sphi 0, %s454
    %s472 = sphi 0, %s472
    %s474 = sphi 0, %s472
    %s475 = sphi 0, %s474
    %s489 = sphi 0, %s475
    %s493 = sphi 0, %s493
    %s495 = sphi 0, %s493
    %s496 = sphi 0, %s495
    %s510 = sphi 0, %s496
    %s514 = sphi 0, %s514
    %s516 = sphi 0, %s514
    %s517 = sphi 0, %s516
    %s531 = sphi 0, %s517
  $region4: #{bert_multilabel_forward.1} parent=0 // loop_header_branch
    %29 = sbr.rel (%p27) target = $region8
  $region5: #{bert_multilabel_forward.1} parent=0 // loop_body
    %s31 = ssub.s32 %s26, 1
    %s32 = ssub.s32 %s26, 2
    %s33 = sadd.s32 %s26, 1
    %s35 = sadd.s32 %s34, 1
    %p38 = scmp.eq.s32.totalorder %s26, 1
    %p39 = scmp.ne.s32.totalorder %s34, %s36
    %p40 = scmp.eq.s32.totalorder %s26, 0
    %p41 = por %p39, %p40
    %p42 = scmp.ne.s32.totalorder %s34, %s36
    %p43 = scmp.eq.s32.totalorder %s31, 1
    %p44 = por %p42, %p43
    %p45 = scmp.ne.s32.totalorder %s36, %s37
    %p46 = scmp.eq.s32.totalorder %s31, 0
    %p47 = por %p45, %p46
    %p48 = scmp.ne.s32.totalorder %s36, %s37
    %p49 = scmp.eq.s32.totalorder %s32, 1
    %p50 = por %p48, %p49
    %p52 = scmp.ne.s32.totalorder %s37, %s51
    %p53 = scmp.eq.s32.totalorder %s32, 0
    %p54 = por %p52, %p53
    %s56 = sadd.s32 %s55, 1
    %p59 = scmp.eq.s32.totalorder %s26, 1
    %p60 = scmp.ne.s32.totalorder %s55, %s57
    %p61 = scmp.eq.s32.totalorder %s26, 0
    %p62 = por %p60, %p61
    %p63 = scmp.ne.s32.totalorder %s55, %s57
    %p64 = scmp.eq.s32.totalorder %s31, 1
    %p65 = por %p63, %p64
    %p66 = scmp.ne.s32.totalorder %s57, %s58
    %p67 = scmp.eq.s32.totalorder %s31, 0
    %p68 = por %p66, %p67
    %p69 = scmp.ne.s32.totalorder %s57, %s58
    %p70 = scmp.eq.s32.totalorder %s32, 1
    %p71 = por %p69, %p70
    %p73 = scmp.ne.s32.totalorder %s58, %s72
    %p74 = scmp.eq.s32.totalorder %s32, 0
    %p75 = por %p73, %p74
    %s77 = sadd.s32 %s76, 1
    %p80 = scmp.eq.s32.totalorder %s26, 1
    %p81 = scmp.ne.s32.totalorder %s76, %s78
    %p82 = scmp.eq.s32.totalorder %s26, 0
    %p83 = por %p81, %p82
    %p84 = scmp.ne.s32.totalorder %s76, %s78
    %p85 = scmp.eq.s32.totalorder %s31, 1
    %p86 = por %p84, %p85
    %p87 = scmp.ne.s32.totalorder %s78, %s79
    %p88 = scmp.eq.s32.totalorder %s31, 0
    %p89 = por %p87, %p88
    %p90 = scmp.ne.s32.totalorder %s78, %s79
    %p91 = scmp.eq.s32.totalorder %s32, 1
    %p92 = por %p90, %p91
    %p94 = scmp.ne.s32.totalorder %s79, %s93
    %p95 = scmp.eq.s32.totalorder %s32, 0
    %p96 = por %p94, %p95
    %s98 = sadd.s32 %s97, 1
    %p101 = scmp.eq.s32.totalorder %s26, 1
    %p102 = scmp.ne.s32.totalorder %s97, %s99
    %p103 = scmp.eq.s32.totalorder %s26, 0
    %p104 = por %p102, %p103
    %p105 = scmp.ne.s32.totalorder %s97, %s99
    %p106 = scmp.eq.s32.totalorder %s31, 1
    %p107 = por %p105, %p106
    %p108 = scmp.ne.s32.totalorder %s99, %s100
    %p109 = scmp.eq.s32.totalorder %s31, 0
    %p110 = por %p108, %p109
    %p111 = scmp.ne.s32.totalorder %s99, %s100
    %p112 = scmp.eq.s32.totalorder %s32, 1
    %p113 = por %p111, %p112
    %p115 = scmp.ne.s32.totalorder %s100, %s114
    %p116 = scmp.eq.s32.totalorder %s32, 0
    %p117 = por %p115, %p116
    %s118 = ssub.s32 %s26, %s33
    %p119 = scmp.eq.s32.totalorder %s118, 0
    %s121 = sadd.s32 %s120, 1
    %s122 = scalar_select %p119, %s120, %s121
    %p125 = pneg %p119
    %p126 = scmp.eq.s32.totalorder %s26, 1
    %p127 = por %p125, %p126
    %p128 = scmp.ne.s32.totalorder %s120, %s123
    %p129 = scmp.eq.s32.totalorder %s26, 0
    %p130 = por %p128, %p129
    %p131 = scmp.ne.s32.totalorder %s120, %s123
    %p132 = scmp.eq.s32.totalorder %s31, 1
    %p133 = por %p131, %p132
    %p134 = scmp.ne.s32.totalorder %s123, %s124
    %p135 = scmp.eq.s32.totalorder %s31, 0
    %p136 = por %p134, %p135
    %p137 = scmp.ne.s32.totalorder %s123, %s124
    %p138 = scmp.eq.s32.totalorder %s32, 1
    %p139 = por %p137, %p138
    %p141 = scmp.ne.s32.totalorder %s124, %s140
    %p142 = scmp.eq.s32.totalorder %s32, 0
    %p143 = por %p141, %p142
    %s144 = ssub.s32 %s26, %s33
    %p145 = scmp.eq.s32.totalorder %s144, 0
    %s147 = sadd.s32 %s146, 1
    %s148 = scalar_select %p145, %s146, %s147
    %p151 = pneg %p145
    %p152 = scmp.eq.s32.totalorder %s26, 1
    %p153 = por %p151, %p152
    %p154 = scmp.ne.s32.totalorder %s146, %s149
    %p155 = scmp.eq.s32.totalorder %s26, 0
    %p156 = por %p154, %p155
    %p157 = scmp.ne.s32.totalorder %s146, %s149
    %p158 = scmp.eq.s32.totalorder %s31, 1
    %p159 = por %p157, %p158
    %p160 = scmp.ne.s32.totalorder %s149, %s150
    %p161 = scmp.eq.s32.totalorder %s31, 0
    %p162 = por %p160, %p161
    %p163 = scmp.ne.s32.totalorder %s149, %s150
    %p164 = scmp.eq.s32.totalorder %s32, 1
    %p165 = por %p163, %p164
    %p167 = scmp.ne.s32.totalorder %s150, %s166
    %p168 = scmp.eq.s32.totalorder %s32, 0
    %p169 = por %p167, %p168
    %s170 = ssub.s32 %s26, %s33
    %p171 = scmp.eq.s32.totalorder %s170, 0
    %s173 = sadd.s32 %s172, 1
    %s174 = scalar_select %p171, %s172, %s173
    %p177 = pneg %p171
    %p178 = scmp.eq.s32.totalorder %s26, 1
    %p179 = por %p177, %p178
    %p180 = scmp.ne.s32.totalorder %s172, %s175
    %p181 = scmp.eq.s32.totalorder %s26, 0
    %p182 = por %p180, %p181
    %p183 = scmp.ne.s32.totalorder %s172, %s175
    %p184 = scmp.eq.s32.totalorder %s31, 1
    %p185 = por %p183, %p184
    %p186 = scmp.ne.s32.totalorder %s175, %s176
    %p187 = scmp.eq.s32.totalorder %s31, 0
    %p188 = por %p186, %p187
    %p189 = scmp.ne.s32.totalorder %s175, %s176
    %p190 = scmp.eq.s32.totalorder %s32, 1
    %p191 = por %p189, %p190
    %p193 = scmp.ne.s32.totalorder %s176, %s192
    %p194 = scmp.eq.s32.totalorder %s32, 0
    %p195 = por %p193, %p194
    %s196 = ssub.s32 %s26, %s33
    %p197 = scmp.eq.s32.totalorder %s196, 0
    %s199 = sadd.s32 %s198, 1
    %s200 = scalar_select %p197, %s198, %s199
    %p203 = pneg %p197
    %p204 = scmp.eq.s32.totalorder %s26, 1
    %p205 = por %p203, %p204
    %p206 = scmp.ne.s32.totalorder %s198, %s201
    %p207 = scmp.eq.s32.totalorder %s26, 0
    %p208 = por %p206, %p207
    %p209 = scmp.ne.s32.totalorder %s198, %s201
    %p210 = scmp.eq.s32.totalorder %s31, 1
    %p211 = por %p209, %p210
    %p212 = scmp.ne.s32.totalorder %s201, %s202
    %p213 = scmp.eq.s32.totalorder %s31, 0
    %p214 = por %p212, %p213
    %p215 = scmp.ne.s32.totalorder %s201, %s202
    %p216 = scmp.eq.s32.totalorder %s32, 1
    %p217 = por %p215, %p216
    %p219 = scmp.ne.s32.totalorder %s202, %s218
    %p220 = scmp.eq.s32.totalorder %s32, 0
    %p221 = por %p219, %p220
    %s222 = ssub.s32 %s26, %s33
    %p223 = scmp.eq.s32.totalorder %s222, 0
    %s225 = sadd.s32 %s224, 1
    %s226 = scalar_select %p223, %s224, %s225
    %p229 = pneg %p223
    %p230 = scmp.eq.s32.totalorder %s26, 1
    %p231 = por %p229, %p230
    %p232 = scmp.ne.s32.totalorder %s224, %s227
    %p233 = scmp.eq.s32.totalorder %s26, 0
    %p234 = por %p232, %p233
    %p235 = scmp.ne.s32.totalorder %s224, %s227
    %p236 = scmp.eq.s32.totalorder %s31, 1
    %p237 = por %p235, %p236
    %p238 = scmp.ne.s32.totalorder %s227, %s228
    %p239 = scmp.eq.s32.totalorder %s31, 0
    %p240 = por %p238, %p239
    %p241 = scmp.ne.s32.totalorder %s227, %s228
    %p242 = scmp.eq.s32.totalorder %s32, 1
    %p243 = por %p241, %p242
    %p245 = scmp.ne.s32.totalorder %s228, %s244
    %p246 = scmp.eq.s32.totalorder %s32, 0
    %p247 = por %p245, %p246
    %s248 = ssub.s32 %s26, %s33
    %p249 = scmp.eq.s32.totalorder %s248, 0
    %s251 = sadd.s32 %s250, 1
    %s252 = scalar_select %p249, %s250, %s251
    %p255 = pneg %p249
    %p256 = scmp.eq.s32.totalorder %s26, 1
    %p257 = por %p255, %p256
    %p258 = scmp.ne.s32.totalorder %s250, %s253
    %p259 = scmp.eq.s32.totalorder %s26, 0
    %p260 = por %p258, %p259
    %p261 = scmp.ne.s32.totalorder %s250, %s253
    %p262 = scmp.eq.s32.totalorder %s31, 1
    %p263 = por %p261, %p262
    %p264 = scmp.ne.s32.totalorder %s253, %s254
    %p265 = scmp.eq.s32.totalorder %s31, 0
    %p266 = por %p264, %p265
    %p267 = scmp.ne.s32.totalorder %s253, %s254
    %p268 = scmp.eq.s32.totalorder %s32, 1
    %p269 = por %p267, %p268
    %p271 = scmp.ne.s32.totalorder %s254, %s270
    %p272 = scmp.eq.s32.totalorder %s32, 0
    %p273 = por %p271, %p272
    %s274 = ssub.s32 %s26, %s33
    %p275 = scmp.eq.s32.totalorder %s274, 0
    %s277 = sadd.s32 %s276, 1
    %s278 = scalar_select %p275, %s276, %s277
    %p281 = pneg %p275
    %p282 = scmp.eq.s32.totalorder %s26, 1
    %p283 = por %p281, %p282
    %p284 = scmp.ne.s32.totalorder %s276, %s279
    %p285 = scmp.eq.s32.totalorder %s26, 0
    %p286 = por %p284, %p285
    %p287 = scmp.ne.s32.totalorder %s276, %s279
    %p288 = scmp.eq.s32.totalorder %s31, 1
    %p289 = por %p287, %p288
    %p290 = scmp.ne.s32.totalorder %s279, %s280
    %p291 = scmp.eq.s32.totalorder %s31, 0
    %p292 = por %p290, %p291
    %p293 = scmp.ne.s32.totalorder %s279, %s280
    %p294 = scmp.eq.s32.totalorder %s32, 1
    %p295 = por %p293, %p294
    %p297 = scmp.ne.s32.totalorder %s280, %s296
    %p298 = scmp.eq.s32.totalorder %s32, 0
    %p299 = por %p297, %p298
    %s300 = ssub.s32 %s26, %s33
    %p301 = scmp.eq.s32.totalorder %s300, 0
    %s303 = sadd.s32 %s302, 1
    %s304 = scalar_select %p301, %s302, %s303
    %p307 = pneg %p301
    %p308 = scmp.eq.s32.totalorder %s26, 1
    %p309 = por %p307, %p308
    %p310 = scmp.ne.s32.totalorder %s302, %s305
    %p311 = scmp.eq.s32.totalorder %s26, 0
    %p312 = por %p310, %p311
    %p313 = scmp.ne.s32.totalorder %s302, %s305
    %p314 = scmp.eq.s32.totalorder %s31, 1
    %p315 = por %p313, %p314
    %p316 = scmp.ne.s32.totalorder %s305, %s306
    %p317 = scmp.eq.s32.totalorder %s31, 0
    %p318 = por %p316, %p317
    %p319 = scmp.ne.s32.totalorder %s305, %s306
    %p320 = scmp.eq.s32.totalorder %s32, 1
    %p321 = por %p319, %p320
    %p323 = scmp.ne.s32.totalorder %s306, %s322
    %p324 = scmp.eq.s32.totalorder %s32, 0
    %p325 = por %p323, %p324
    %s326 = ssub.s32 %s26, %s33
    %p327 = scmp.eq.s32.totalorder %s326, 0
    %s329 = sadd.s32 %s328, 1
    %s330 = scalar_select %p327, %s328, %s329
    %p333 = pneg %p327
    %p334 = scmp.eq.s32.totalorder %s26, 1
    %p335 = por %p333, %p334
    %p336 = scmp.ne.s32.totalorder %s328, %s331
    %p337 = scmp.eq.s32.totalorder %s26, 0
    %p338 = por %p336, %p337
    %p339 = scmp.ne.s32.totalorder %s328, %s331
    %p340 = scmp.eq.s32.totalorder %s31, 1
    %p341 = por %p339, %p340
    %p342 = scmp.ne.s32.totalorder %s331, %s332
    %p343 = scmp.eq.s32.totalorder %s31, 0
    %p344 = por %p342, %p343
    %p345 = scmp.ne.s32.totalorder %s331, %s332
    %p346 = scmp.eq.s32.totalorder %s32, 1
    %p347 = por %p345, %p346
    %p349 = scmp.ne.s32.totalorder %s332, %s348
    %p350 = scmp.eq.s32.totalorder %s32, 0
    %p351 = por %p349, %p350
    %s352 = ssub.s32 %s26, %s33
    %p353 = scmp.eq.s32.totalorder %s352, 0
    %s355 = sadd.s32 %s354, 1
    %s356 = scalar_select %p353, %s354, %s355
    %p359 = pneg %p353
    %p360 = scmp.eq.s32.totalorder %s26, 1
    %p361 = por %p359, %p360
    %p362 = scmp.ne.s32.totalorder %s354, %s357
    %p363 = scmp.eq.s32.totalorder %s26, 0
    %p364 = por %p362, %p363
    %p365 = scmp.ne.s32.totalorder %s354, %s357
    %p366 = scmp.eq.s32.totalorder %s31, 1
    %p367 = por %p365, %p366
    %p368 = scmp.ne.s32.totalorder %s357, %s358
    %p369 = scmp.eq.s32.totalorder %s31, 0
    %p370 = por %p368, %p369
    %p371 = scmp.ne.s32.totalorder %s357, %s358
    %p372 = scmp.eq.s32.totalorder %s32, 1
    %p373 = por %p371, %p372
    %p375 = scmp.ne.s32.totalorder %s358, %s374
    %p376 = scmp.eq.s32.totalorder %s32, 0
    %p377 = por %p375, %p376
    %s378 = ssub.s32 %s26, %s33
    %p379 = scmp.eq.s32.totalorder %s378, 0
    %s381 = sadd.s32 %s380, 1
    %s382 = scalar_select %p379, %s380, %s381
    %p385 = pneg %p379
    %p386 = scmp.eq.s32.totalorder %s26, 1
    %p387 = por %p385, %p386
    %p388 = scmp.ne.s32.totalorder %s380, %s383
    %p389 = scmp.eq.s32.totalorder %s26, 0
    %p390 = por %p388, %p389
    %p391 = scmp.ne.s32.totalorder %s380, %s383
    %p392 = scmp.eq.s32.totalorder %s31, 1
    %p393 = por %p391, %p392
    %p394 = scmp.ne.s32.totalorder %s383, %s384
    %p395 = scmp.eq.s32.totalorder %s31, 0
    %p396 = por %p394, %p395
    %p397 = scmp.ne.s32.totalorder %s383, %s384
    %p398 = scmp.eq.s32.totalorder %s32, 1
    %p399 = por %p397, %p398
    %p401 = scmp.ne.s32.totalorder %s384, %s400
    %p402 = scmp.eq.s32.totalorder %s32, 0
    %p403 = por %p401, %p402
    %s404 = ssub.s32 %s26, %s33
    %p405 = scmp.eq.s32.totalorder %s404, 0
    %s407 = sadd.s32 %s406, 1
    %s408 = scalar_select %p405, %s406, %s407
    %p411 = pneg %p405
    %p412 = scmp.eq.s32.totalorder %s26, 1
    %p413 = por %p411, %p412
    %p414 = scmp.ne.s32.totalorder %s406, %s409
    %p415 = scmp.eq.s32.totalorder %s26, 0
    %p416 = por %p414, %p415
    %p417 = scmp.ne.s32.totalorder %s406, %s409
    %p418 = scmp.eq.s32.totalorder %s31, 1
    %p419 = por %p417, %p418
    %p420 = scmp.ne.s32.totalorder %s409, %s410
    %p421 = scmp.eq.s32.totalorder %s31, 0
    %p422 = por %p420, %p421
    %p423 = scmp.ne.s32.totalorder %s409, %s410
    %p424 = scmp.eq.s32.totalorder %s32, 1
    %p425 = por %p423, %p424
    %p427 = scmp.ne.s32.totalorder %s410, %s426
    %p428 = scmp.eq.s32.totalorder %s32, 0
    %p429 = por %p427, %p428
    %s431 = sadd.s32 %s430, 1
    %p434 = scmp.eq.s32.totalorder %s26, 1
    %p435 = scmp.ne.s32.totalorder %s430, %s432
    %p436 = scmp.eq.s32.totalorder %s26, 0
    %p437 = por %p435, %p436
    %p438 = scmp.ne.s32.totalorder %s430, %s432
    %p439 = scmp.eq.s32.totalorder %s31, 1
    %p440 = por %p438, %p439
    %p441 = scmp.ne.s32.totalorder %s432, %s433
    %p442 = scmp.eq.s32.totalorder %s31, 0
    %p443 = por %p441, %p442
    %p444 = scmp.ne.s32.totalorder %s432, %s433
    %p445 = scmp.eq.s32.totalorder %s32, 1
    %p446 = por %p444, %p445
    %p448 = scmp.ne.s32.totalorder %s433, %s447
    %p449 = scmp.eq.s32.totalorder %s32, 0
    %p450 = por %p448, %p449
    %s452 = sadd.s32 %s451, 1
    %p455 = scmp.eq.s32.totalorder %s26, 1
    %p456 = scmp.ne.s32.totalorder %s451, %s453
    %p457 = scmp.eq.s32.totalorder %s26, 0
    %p458 = por %p456, %p457
    %p459 = scmp.ne.s32.totalorder %s451, %s453
    %p460 = scmp.eq.s32.totalorder %s31, 1
    %p461 = por %p459, %p460
    %p462 = scmp.ne.s32.totalorder %s453, %s454
    %p463 = scmp.eq.s32.totalorder %s31, 0
    %p464 = por %p462, %p463
    %p465 = scmp.ne.s32.totalorder %s453, %s454
    %p466 = scmp.eq.s32.totalorder %s32, 1
    %p467 = por %p465, %p466
    %p469 = scmp.ne.s32.totalorder %s454, %s468
    %p470 = scmp.eq.s32.totalorder %s32, 0
    %p471 = por %p469, %p470
    %s473 = sadd.s32 %s472, 1
    %p476 = scmp.eq.s32.totalorder %s26, 1
    %p477 = scmp.ne.s32.totalorder %s472, %s474
    %p478 = scmp.eq.s32.totalorder %s26, 0
    %p479 = por %p477, %p478
    %p480 = scmp.ne.s32.totalorder %s472, %s474
    %p481 = scmp.eq.s32.totalorder %s31, 1
    %p482 = por %p480, %p481
    %p483 = scmp.ne.s32.totalorder %s474, %s475
    %p484 = scmp.eq.s32.totalorder %s31, 0
    %p485 = por %p483, %p484
    %p486 = scmp.ne.s32.totalorder %s474, %s475
    %p487 = scmp.eq.s32.totalorder %s32, 1
    %p488 = por %p486, %p487
    %p490 = scmp.ne.s32.totalorder %s475, %s489
    %p491 = scmp.eq.s32.totalorder %s32, 0
    %p492 = por %p490, %p491
    %s494 = sadd.s32 %s493, 1
    %p497 = scmp.eq.s32.totalorder %s26, 1
    %p498 = scmp.ne.s32.totalorder %s493, %s495
    %p499 = scmp.eq.s32.totalorder %s26, 0
    %p500 = por %p498, %p499
    %p501 = scmp.ne.s32.totalorder %s493, %s495
    %p502 = scmp.eq.s32.totalorder %s31, 1
    %p503 = por %p501, %p502
    %p504 = scmp.ne.s32.totalorder %s495, %s496
    %p505 = scmp.eq.s32.totalorder %s31, 0
    %p506 = por %p504, %p505
    %p507 = scmp.ne.s32.totalorder %s495, %s496
    %p508 = scmp.eq.s32.totalorder %s32, 1
    %p509 = por %p507, %p508
    %p511 = scmp.ne.s32.totalorder %s496, %s510
    %p512 = scmp.eq.s32.totalorder %s32, 0
    %p513 = por %p511, %p512
    %s515 = sadd.s32 %s514, 1
    %p518 = scmp.eq.s32.totalorder %s26, 1
    %p519 = scmp.ne.s32.totalorder %s514, %s516
    %p520 = scmp.eq.s32.totalorder %s26, 0
    %p521 = por %p519, %p520
    %p522 = scmp.ne.s32.totalorder %s514, %s516
    %p523 = scmp.eq.s32.totalorder %s31, 1
    %p524 = por %p522, %p523
    %p525 = scmp.ne.s32.totalorder %s516, %s517
    %p526 = scmp.eq.s32.totalorder %s31, 0
    %p527 = por %p525, %p526
    %p528 = scmp.ne.s32.totalorder %s516, %s517
    %p529 = scmp.eq.s32.totalorder %s32, 1
    %p530 = por %p528, %p529
    %p532 = scmp.ne.s32.totalorder %s517, %s531
    %p533 = scmp.eq.s32.totalorder %s32, 0
    %p534 = por %p532, %p533
    %p535 = scmp.le.s32.totalorder 1, %s26
    %p536 = scmp.lt.s32.totalorder %s26, 3
    %p537 = pnand %p535, %p536
    %p538 = pneg %p537
    // Predicated region
    $region9: #{bert_multilabel_forward.1} parent=5 // pred_check
      _
    $region10: #{bert_multilabel_forward.1} parent=5 // pred_check_branch
      %540 = sbr.rel (%p537) target = $region12
    $region11: #{bert_multilabel_forward.1} parent=5 // pred_region
      %s541 = ssub.s32 %s26, 1
      // Predicated region
      $region13: #{bert_multilabel_forward.1} parent=11 // pred_check
        %p542 = pneg %p47
      $region14: #{bert_multilabel_forward.1} parent=11 // pred_check_branch
        %544 = sbr.rel (%p542) target = $region16
      $region15: #{bert_multilabel_forward.1} parent=11 // pred_region
        _
      $region16: #{bert_multilabel_forward.1} parent=11 // pred_fallthru
        _
      // Predicated region
      $region17: #{bert_multilabel_forward.1} parent=11 // pred_check
        %p545 = pneg %p68
      $region18: #{bert_multilabel_forward.1} parent=11 // pred_check_branch
        %547 = sbr.rel (%p545) target = $region20
      $region19: #{bert_multilabel_forward.1} parent=11 // pred_region
        _
      $region20: #{bert_multilabel_forward.1} parent=11 // pred_fallthru
        _
      // Predicated region
      $region21: #{bert_multilabel_forward.1} parent=11 // pred_check
        %p548 = pneg %p89
      $region22: #{bert_multilabel_forward.1} parent=11 // pred_check_branch
        %550 = sbr.rel (%p548) target = $region24
      $region23: #{bert_multilabel_forward.1} parent=11 // pred_region
        _
      $region24: #{bert_multilabel_forward.1} parent=11 // pred_fallthru
        _
      // Predicated region
      $region25: #{bert_multilabel_forward.1} parent=11 // pred_check
        %p551 = pneg %p110
      $region26: #{bert_multilabel_forward.1} parent=11 // pred_check_branch
        %553 = sbr.rel (%p551) target = $region28
      $region27: #{bert_multilabel_forward.1} parent=11 // pred_region
        _
      $region28: #{bert_multilabel_forward.1} parent=11 // pred_fallthru
        _
      // Predicated region
      $region29: #{bert_multilabel_forward.1} parent=11 // pred_check
        %p554 = pneg %p443
      $region30: #{bert_multilabel_forward.1} parent=11 // pred_check_branch
        %556 = sbr.rel (%p554) target = $region32
      $region31: #{bert_multilabel_forward.1} parent=11 // pred_region
        _
      $region32: #{bert_multilabel_forward.1} parent=11 // pred_fallthru
        _
      // Predicated region
      $region33: #{bert_multilabel_forward.1} parent=11 // pred_check
        %p557 = pneg %p464
      $region34: #{bert_multilabel_forward.1} parent=11 // pred_check_branch
        %559 = sbr.rel (%p557) target = $region36
      $region35: #{bert_multilabel_forward.1} parent=11 // pred_region
        _
      $region36: #{bert_multilabel_forward.1} parent=11 // pred_fallthru
        _
      // Predicated region
      $region37: #{bert_multilabel_forward.1} parent=11 // pred_check
        %p560 = pneg %p485
      $region38: #{bert_multilabel_forward.1} parent=11 // pred_check_branch
        %562 = sbr.rel (%p560) target = $region40
      $region39: #{bert_multilabel_forward.1} parent=11 // pred_region
        _
      $region40: #{bert_multilabel_forward.1} parent=11 // pred_fallthru
        _
      // Predicated region
      $region41: #{bert_multilabel_forward.1} parent=11 // pred_check
        %p563 = pneg %p506
      $region42: #{bert_multilabel_forward.1} parent=11 // pred_check_branch
        %565 = sbr.rel (%p563) target = $region44
      $region43: #{bert_multilabel_forward.1} parent=11 // pred_region
        _
      $region44: #{bert_multilabel_forward.1} parent=11 // pred_fallthru
        _
    $region12: #{bert_multilabel_forward.1} parent=5 // pred_fallthru
      _
    %p566 = scmp.lt.s32.totalorder %s26, 2
    // Predicated region
    $region45: #{bert_multilabel_forward.1} parent=5 // pred_check
      %p567 = pneg %p566
    $region46: #{bert_multilabel_forward.1} parent=5 // pred_check_branch
      %569 = sbr.rel (%p567) target = $region48
    $region47: #{bert_multilabel_forward.1} parent=5 // pred_region
      // Predicated region
      $region49: #{bert_multilabel_forward.1} parent=47 // pred_check
        %p570 = pneg %p130
      $region50: #{bert_multilabel_forward.1} parent=47 // pred_check_branch
        %572 = sbr.rel (%p570) target = $region52
      $region51: #{bert_multilabel_forward.1} parent=47 // pred_region
        %p573 = scmp.lt.s32.totalorder %s26, 1
        %s574 = scalar_select %p573, %s26, 1
        %s575 = smul.addr %s574, 4
        %s576 = smul.addr %s575, 4
        %s577 = scalar_lea.vmem %s4, %s576
      $region52: #{bert_multilabel_forward.1} parent=47 // pred_fallthru
        _
      // Predicated region
      $region53: #{bert_multilabel_forward.1} parent=47 // pred_check
        %p578 = pneg %p156
      $region54: #{bert_multilabel_forward.1} parent=47 // pred_check_branch
        %580 = sbr.rel (%p578) target = $region56
      $region55: #{bert_multilabel_forward.1} parent=47 // pred_region
        %p581 = scmp.lt.s32.totalorder %s26, 1
        %s582 = scalar_select %p581, %s26, 1
        %s583 = scalar_lea.vmem %s5, %s582
      $region56: #{bert_multilabel_forward.1} parent=47 // pred_fallthru
        _
      // Predicated region
      $region57: #{bert_multilabel_forward.1} parent=47 // pred_check
        %p584 = pneg %p182
      $region58: #{bert_multilabel_forward.1} parent=47 // pred_check_branch
        %586 = sbr.rel (%p584) target = $region60
      $region59: #{bert_multilabel_forward.1} parent=47 // pred_region
        %p587 = scmp.lt.s32.totalorder %s26, 1
        %s588 = scalar_select %p587, %s26, 1
        %s589 = smul.addr %s588, 4
        %s590 = smul.addr %s589, 4
        %s591 = scalar_lea.vmem %s6, %s590
      $region60: #{bert_multilabel_forward.1} parent=47 // pred_fallthru
        _
      // Predicated region
      $region61: #{bert_multilabel_forward.1} parent=47 // pred_check
        %p592 = pneg %p208
      $region62: #{bert_multilabel_forward.1} parent=47 // pred_check_branch
        %594 = sbr.rel (%p592) target = $region64
      $region63: #{bert_multilabel_forward.1} parent=47 // pred_region
        %p595 = scmp.lt.s32.totalorder %s26, 1
        %s596 = scalar_select %p595, %s26, 1
        %s597 = scalar_lea.vmem %s7, %s596
      $region64: #{bert_multilabel_forward.1} parent=47 // pred_fallthru
        _
      // Predicated region
      $region65: #{bert_multilabel_forward.1} parent=47 // pred_check
        %p598 = pneg %p234
      $region66: #{bert_multilabel_forward.1} parent=47 // pred_check_branch
        %600 = sbr.rel (%p598) target = $region68
      $region67: #{bert_multilabel_forward.1} parent=47 // pred_region
        %p601 = scmp.lt.s32.totalorder %s26, 1
        %s602 = scalar_select %p601, %s26, 1
        %s603 = scalar_lea.vmem %s8, %s602
      $region68: #{bert_multilabel_forward.1} parent=47 // pred_fallthru
        _
      // Predicated region
      $region69: #{bert_multilabel_forward.1} parent=47 // pred_check
        %p604 = pneg %p260
      $region70: #{bert_multilabel_forward.1} parent=47 // pred_check_branch
        %606 = sbr.rel (%p604) target = $region72
      $region71: #{bert_multilabel_forward.1} parent=47 // pred_region
        %p607 = scmp.lt.s32.totalorder %s26, 1
        %s608 = scalar_select %p607, %s26, 1
        %s609 = scalar_lea.vmem %s9, %s608
      $region72: #{bert_multilabel_forward.1} parent=47 // pred_fallthru
        _
      // Predicated region
      $region73: #{bert_multilabel_forward.1} parent=47 // pred_check
        %p610 = pneg %p286
      $region74: #{bert_multilabel_forward.1} parent=47 // pred_check_branch
        %612 = sbr.rel (%p610) target = $region76
      $region75: #{bert_multilabel_forward.1} parent=47 // pred_region
        %p613 = scmp.lt.s32.totalorder %s26, 1
        %s614 = scalar_select %p613, %s26, 1
        %s615 = smul.addr %s614, 4
        %s616 = smul.addr %s615, 4
        %s617 = scalar_lea.vmem %s10, %s616
      $region76: #{bert_multilabel_forward.1} parent=47 // pred_fallthru
        _
      // Predicated region
      $region77: #{bert_multilabel_forward.1} parent=47 // pred_check
        %p618 = pneg %p312
      $region78: #{bert_multilabel_forward.1} parent=47 // pred_check_branch
        %620 = sbr.rel (%p618) target = $region80
      $region79: #{bert_multilabel_forward.1} parent=47 // pred_region
        %p621 = scmp.lt.s32.totalorder %s26, 1
        %s622 = scalar_select %p621, %s26, 1
        %s623 = scalar_lea.vmem %s11, %s622
      $region80: #{bert_multilabel_forward.1} parent=47 // pred_fallthru
        _
      // Predicated region
      $region81: #{bert_multilabel_forward.1} parent=47 // pred_check
        %p624 = pneg %p338
      $region82: #{bert_multilabel_forward.1} parent=47 // pred_check_branch
        %626 = sbr.rel (%p624) target = $region84
      $region83: #{bert_multilabel_forward.1} parent=47 // pred_region
        %p627 = scmp.lt.s32.totalorder %s26, 1
        %s628 = scalar_select %p627, %s26, 1
        %s629 = smul.addr %s628, 16
        %s630 = smul.addr %s629, 4
        %s631 = scalar_lea.vmem %s12, %s630
      $region84: #{bert_multilabel_forward.1} parent=47 // pred_fallthru
        _
      // Predicated region
      $region85: #{bert_multilabel_forward.1} parent=47 // pred_check
        %p632 = pneg %p364
      $region86: #{bert_multilabel_forward.1} parent=47 // pred_check_branch
        %634 = sbr.rel (%p632) target = $region88
      $region87: #{bert_multilabel_forward.1} parent=47 // pred_region
        %p635 = scmp.lt.s32.totalorder %s26, 1
        %s636 = scalar_select %p635, %s26, 1
        %s637 = scalar_lea.vmem %s13, %s636
      $region88: #{bert_multilabel_forward.1} parent=47 // pred_fallthru
        _
      // Predicated region
      $region89: #{bert_multilabel_forward.1} parent=47 // pred_check
        %p638 = pneg %p390
      $region90: #{bert_multilabel_forward.1} parent=47 // pred_check_branch
        %640 = sbr.rel (%p638) target = $region92
      $region91: #{bert_multilabel_forward.1} parent=47 // pred_region
        %p641 = scmp.lt.s32.totalorder %s26, 1
        %s642 = scalar_select %p641, %s26, 1
        %s643 = scalar_lea.vmem %s14, %s642
      $region92: #{bert_multilabel_forward.1} parent=47 // pred_fallthru
        _
      // Predicated region
      $region93: #{bert_multilabel_forward.1} parent=47 // pred_check
        %p644 = pneg %p416
      $region94: #{bert_multilabel_forward.1} parent=47 // pred_check_branch
        %646 = sbr.rel (%p644) target = $region96
      $region95: #{bert_multilabel_forward.1} parent=47 // pred_region
        %p647 = scmp.lt.s32.totalorder %s26, 1
        %s648 = scalar_select %p647, %s26, 1
        %s649 = scalar_lea.vmem %s15, %s648
      $region96: #{bert_multilabel_forward.1} parent=47 // pred_fallthru
        _
    $region48: #{bert_multilabel_forward.1} parent=5 // pred_fallthru
      _
    %p650 = scmp.le.s32.totalorder 1, %s26
    %p651 = scmp.lt.s32.totalorder %s26, 3
    %p652 = pnand %p650, %p651
    %p653 = pneg %p652
    // Predicated region
    $region97: #{bert_multilabel_forward.1} parent=5 // pred_check
      _
    $region98: #{bert_multilabel_forward.1} parent=5 // pred_check_branch
      %655 = sbr.rel (%p652) target = $region100
    $region99: #{bert_multilabel_forward.1} parent=5 // pred_region
      %s656 = ssub.s32 %s26, 1
      %p657 = pneg %p47
      %p658 = pneg %p44
      %p659 = pneg %p68
      %p660 = pneg %p65
      %p661 = pneg %p89
      %p662 = pneg %p86
      %p663 = pneg %p110
      %p664 = pneg %p107
      %p665 = scmp.lt.s32.totalorder %s31, 1
      %s666 = scalar_select %p665, %s31, 1
      %s667 = smul.addr %s666, 4
      %s668 = smul.addr %s667, 4
      %s669 = scalar_lea.vmem %s4, %s668
      %p670 = pneg %p136
      %p671 = pneg %p133
      %p672 = scmp.lt.s32.totalorder %s31, 1
      %s673 = scalar_select %p672, %s31, 1
      %s674 = scalar_lea.vmem %s5, %s673
      %p675 = pneg %p162
      %p676 = pneg %p159
      %p677 = scmp.lt.s32.totalorder %s31, 1
      %s678 = scalar_select %p677, %s31, 1
      %s679 = smul.addr %s678, 4
      %s680 = smul.addr %s679, 4
      %s681 = scalar_lea.vmem %s6, %s680
      %p682 = pneg %p188
      %p683 = pneg %p185
      %p684 = scmp.lt.s32.totalorder %s31, 1
      %s685 = scalar_select %p684, %s31, 1
      %s686 = scalar_lea.vmem %s7, %s685
      %p687 = pneg %p214
      %p688 = pneg %p211
      %p689 = scmp.lt.s32.totalorder %s31, 1
      %s690 = scalar_select %p689, %s31, 1
      %s691 = scalar_lea.vmem %s8, %s690
      %p692 = pneg %p240
      %p693 = pneg %p237
      %p694 = scmp.lt.s32.totalorder %s31, 1
      %s695 = scalar_select %p694, %s31, 1
      %s696 = scalar_lea.vmem %s9, %s695
      %p697 = pneg %p266
      %p698 = pneg %p263
      %p699 = scmp.lt.s32.totalorder %s31, 1
      %s700 = scalar_select %p699, %s31, 1
      %s701 = smul.addr %s700, 4
      %s702 = smul.addr %s701, 4
      %s703 = scalar_lea.vmem %s10, %s702
      %p704 = pneg %p292
      %p705 = pneg %p289
      %p706 = scmp.lt.s32.totalorder %s31, 1
      %s707 = scalar_select %p706, %s31, 1
      %s708 = scalar_lea.vmem %s11, %s707
      %p709 = pneg %p318
      %p710 = pneg %p315
      %p711 = scmp.lt.s32.totalorder %s31, 1
      %s712 = scalar_select %p711, %s31, 1
      %s713 = smul.addr %s712, 16
      %s714 = smul.addr %s713, 4
      %s715 = scalar_lea.vmem %s12, %s714
      %p716 = pneg %p344
      %p717 = pneg %p341
      %p718 = scmp.lt.s32.totalorder %s31, 1
      %s719 = scalar_select %p718, %s31, 1
      %s720 = scalar_lea.vmem %s13, %s719
      %p721 = pneg %p370
      %p722 = pneg %p367
      %p723 = scmp.lt.s32.totalorder %s31, 1
      %s724 = scalar_select %p723, %s31, 1
      %s725 = scalar_lea.vmem %s14, %s724
      %p726 = pneg %p396
      %p727 = pneg %p393
      %p728 = scmp.lt.s32.totalorder %s31, 1
      %s729 = scalar_select %p728, %s31, 1
      %s730 = scalar_lea.vmem %s15, %s729
      %p731 = pneg %p422
      %p732 = pneg %p419
      %p733 = pneg %p443
      %p734 = pneg %p440
      %p735 = pneg %p464
      %p736 = pneg %p461
      %p737 = pneg %p485
      %p738 = pneg %p482
      %p739 = pneg %p506
      %p740 = pneg %p503
      %p741 = pneg %p527
      %p742 = pneg %p524
      %p743 = scmp.lt.s32.totalorder %s31, 1
      %s744 = scalar_select %p743, %s31, 1
      %s745 = smul.addr %s744, 4
      %s746 = smul.addr %s745, 4
      %s747 = scalar_lea.vmem %s4, %s746
      %p748 = scmp.lt.s32.totalorder %s31, 1
      %s749 = scalar_select %p748, %s31, 1
      %s750 = scalar_lea.vmem %s5, %s749
      %p751 = scmp.lt.s32.totalorder %s31, 1
      %s752 = scalar_select %p751, %s31, 1
      %s753 = smul.addr %s752, 4
      %s754 = smul.addr %s753, 4
      %s755 = scalar_lea.vmem %s6, %s754
      %p756 = scmp.lt.s32.totalorder %s31, 1
      %s757 = scalar_select %p756, %s31, 1
      %s758 = scalar_lea.vmem %s7, %s757
      %p759 = scmp.lt.s32.totalorder %s31, 1
      %s760 = scalar_select %p759, %s31, 1
      %s761 = scalar_lea.vmem %s8, %s760
      %p762 = scmp.lt.s32.totalorder %s31, 1
      %s763 = scalar_select %p762, %s31, 1
      %s764 = scalar_lea.vmem %s9, %s763
      %p765 = scmp.lt.s32.totalorder %s31, 1
      %s766 = scalar_select %p765, %s31, 1
      %s767 = smul.addr %s766, 4
      %s768 = smul.addr %s767, 4
      %s769 = scalar_lea.vmem %s10, %s768
      %p770 = scmp.lt.s32.totalorder %s31, 1
      %s771 = scalar_select %p770, %s31, 1
      %s772 = scalar_lea.vmem %s11, %s771
      %p773 = scmp.lt.s32.totalorder %s31, 1
      %s774 = scalar_select %p773, %s31, 1
      %s775 = smul.addr %s774, 16
      %s776 = smul.addr %s775, 4
      %s777 = scalar_lea.vmem %s12, %s776
      %p778 = scmp.lt.s32.totalorder %s31, 1
      %s779 = scalar_select %p778, %s31, 1
      %s780 = scalar_lea.vmem %s13, %s779
      %p781 = scmp.lt.s32.totalorder %s31, 1
      %s782 = scalar_select %p781, %s31, 1
      %s783 = scalar_lea.vmem %s14, %s782
      %p784 = scmp.lt.s32.totalorder %s31, 1
      %s785 = scalar_select %p784, %s31, 1
      %s786 = scalar_lea.vmem %s15, %s785
      %p788 = scmp.eq.s32.totalorder %s31, 0
      // Predicated region
      $region101: #{bert_multilabel_forward.1} parent=99 // pred_check
        %p789 = pneg %p788
      $region102: #{bert_multilabel_forward.1} parent=99 // pred_check_branch
        %791 = sbr.rel (%p789) target = $region104
      $region103: #{bert_multilabel_forward.1} parent=99 // pred_region
        %v792 = vld [vmem:[%s0] sm:$0xff]
        %v793 = vld [vmem:[%s0 + $0x8] sm:$0xff]
        %v794 = vld [vmem:[%s2] sm:$0x1]
        %v795 = vld [vmem:[%s3] sm:$0x1]
        %vm796 = vcmask 261120
        %v797 = vsel %vm796, %v792, 0.0
        %798 = vadd.xlane.f32.xlu0 %v797
        %v799 = vpop.xlane.xlu0 %798
        %v800 = vsel %vm796, %v793, 0.0
        %801 = vadd.xlane.f32.xlu0 %v800
        %v802 = vpop.xlane.xlu0 %801
        %v803 = vrcp.pop 32.0
        %v804 = vmul.f32 %v799, %v803
        %v805 = vmul.f32 %v802, %v803
        %v806 = vsub.f32 %v792, %v804
        %v807 = vsub.f32 %v793, %v805
        %v808 = vmul.f32 %v806, %v806
        %v809 = vmul.f32 %v807, %v807
        %v810 = vsel %vm796, %v808, 0.0
        %811 = vadd.xlane.f32.xlu0 %v810
        %v812 = vpop.xlane.xlu0 %811
        %v813 = vsel %vm796, %v809, 0.0
        %814 = vadd.xlane.f32.xlu0 %v813
        %v815 = vpop.xlane.xlu0 %814
        %v816 = vmul.f32 %v812, %v803
        %v817 = vmul.f32 %v815, %v803
        %v818 = vadd.f32 %v816, 1e-12
        %v819 = vadd.f32 %v817, 1e-12
        %v820 = vrsqrt.pop %v818
        %v821 = vrsqrt.pop %v819
        %v822 = vmul.f32 %v806, %v820
        %v823 = vmul.f32 %v807, %v821
        %v825 = vlaneseq
        %v826 = vshrl.u32 %v825, 7
        %v827 = vsub.s32 0, %v826
        %v828 = vrot.slane %v794, %v827
        %v830 = vmul.f32 %v822, %v828
        %v831 = vmul.f32 %v823, %v828
        %v833 = vlaneseq
        %v834 = vshrl.u32 %v833, 7
        %v835 = vsub.s32 0, %v834
        %v836 = vrot.slane %v795, %v835
        %v838 = vadd.f32 %v830, %v836
        %v839 = vadd.f32 %v831, %v836
        %840 = vst.msk [vmem:[#allocation2] sm:$0xff] %vm796, %v838
        %841 = vst.msk [vmem:[#allocation2 + $0x8] sm:$0xff] %vm796, %v839
      $region104: #{bert_multilabel_forward.1} parent=99 // pred_fallthru
        _
      %v842 = vld [vmem:[#allocation2] sm:$0xff]
      %v843 = vld [vmem:[#allocation2 + $0x8] sm:$0xff]
      %v844 = vld [vmem:[%s1] sm:$0xff]
      %v845 = vld [vmem:[%s1 + $0x8] sm:$0xff]
      %v846 = vpack.c.bf16 %v843, %v842
      %v847 = vld [vmem:[%s747] sm:$0xf]
      %v848 = vld [vmem:[%s747 + $0x4] sm:$0xf]
      %v849 = vld [vmem:[%s747 + $0x8] sm:$0xf]
      %v850 = vld [vmem:[%s747 + $0xc] sm:$0xf]
      %v851 = vld [vmem:[%s750] sm:$0x1]
      %v853 = vlaneseq
      %v854 = vshrl.u32 %v853, 7
      %v855 = vsub.s32 0, %v854
      %v856 = vrot.slane %v851, %v855
      %v862 = vunpack.c.l.b16 %v847
      %v863 = vunpack.c.l.b16 %v848
      %v864 = vunpack.c.l.b16 %v849
      %v865 = vunpack.c.l.b16 %v850
      %v866 = vpack.c.b16 %v863, %v862
      %v867 = vpack.c.b16 %v865, %v864
      %vm870 = vcmask 261120
      %v872 = vsel %vm870, %v846, 0
      %874 = vmatprep.subr.bf16.mxu0 0
      %875 = vmatpush1.bf16.msra.mxu0 %v866
      %876 = vmatprep.subr.bf16.mxu0 0
      %877 = vmatpush1.bf16.msra.mxu0 %v867
      %878 = vmatprep.subr.bf16.mxu0 0
      %879 = vmatpush1.bf16.msra.mxu0 0
      %880 = vmatprep.subr.bf16.mxu0 0
      %881 = vmatpush1.bf16.msra.mxu0 0
      %882 = vmatprep.subr.bf16.mxu0 0
      %883 = vmatpush1.bf16.msra.mxu0 0
      %884 = vmatprep.subr.bf16.mxu0 0
      %885 = vmatpush1.bf16.msra.mxu0 0
      %886 = vmatprep.subr.bf16.mxu0 0
      %887 = vmatpush1.bf16.msra.mxu0 0
      %888 = vmatprep.subr.bf16.mxu0 0
      %889 = vmatpush1.bf16.msra.mxu0 0
      %890 = vmatprep.subr.bf16.mxu0 0
      %891 = vmatpush1.bf16.msra.mxu0 0
      %892 = vmatprep.subr.bf16.mxu0 0
      %893 = vmatpush1.bf16.msra.mxu0 0
      %894 = vmatprep.subr.bf16.mxu0 0
      %895 = vmatpush1.bf16.msra.mxu0 0
      %896 = vmatprep.subr.bf16.mxu0 0
      %897 = vmatpush1.bf16.msra.mxu0 0
      %898 = vmatprep.subr.bf16.mxu0 0
      %899 = vmatpush1.bf16.msra.mxu0 0
      %900 = vmatprep.subr.bf16.mxu0 0
      %901 = vmatpush1.bf16.msra.mxu0 0
      %902 = vmatprep.subr.bf16.mxu0 0
      %903 = vmatpush1.bf16.msra.mxu0 0
      %904 = vmatprep.subr.bf16.mxu0 0
      %905 = vmatpush1.bf16.msra.mxu0 0
      %906 = vmatprep.mubr.bf16.mxu0 0
      %907 = vmatmul.mubr.bf16.gmra.mrb[0].mxu0 %v872
      %v908 = vpop.f32.mrb[0].mxu0
      %v909 = vadd.f32 %v856, %v908
      %v910 = vpop.f32.mrb[0].mxu0
      %v911 = vpop.f32.mrb[0].mxu0
      %v912 = vadd.f32 %v856, %v911
      %v913 = vpop.f32.mrb[0].mxu0
      %914 = vdwg.mxu0
      %v915 = vpack.c.bf16 %v912, %v909
      %917 = vrot.lane.b32.xlu0 %v915, 96
      %v918 = vpop.permute.xlu0 %917
      %vm919 = vcmask 130048
      %v921 = vsel %vm919, %v915, 0
      %v924 = vsel %vm919, %v918, 0
      %926 = vmatprep.subr.bf16.mxu0 0
      %927 = vmatpush1.bf16.xpose.msra.mxu0 %v924
      %928 = vmatprep.subr.bf16.mxu0 0
      %929 = vmatpush1.bf16.xpose.msra.mxu0 0
      %930 = vmatprep.subr.bf16.mxu0 0
      %931 = vmatpush1.bf16.xpose.msra.mxu0 0
      %932 = vmatprep.subr.bf16.mxu0 0
      %933 = vmatpush1.bf16.xpose.msra.mxu0 0
      %934 = vmatprep.subr.bf16.mxu0 0
      %935 = vmatpush1.bf16.xpose.msra.mxu0 0
      %936 = vmatprep.subr.bf16.mxu0 0
      %937 = vmatpush1.bf16.xpose.msra.mxu0 0
      %938 = vmatprep.subr.bf16.mxu0 0
      %939 = vmatpush1.bf16.xpose.msra.mxu0 0
      %940 = vmatprep.subr.bf16.mxu0 0
      %941 = vmatpush1.bf16.xpose.msra.mxu0 0
      %942 = vmatprep.subr.bf16.mxu0 0
      %943 = vmatpush1.bf16.xpose.msra.mxu0 0
      %944 = vmatprep.subr.bf16.mxu0 0
      %945 = vmatpush1.bf16.xpose.msra.mxu0 0
      %946 = vmatprep.subr.bf16.mxu0 0
      %947 = vmatpush1.bf16.xpose.msra.mxu0 0
      %948 = vmatprep.subr.bf16.mxu0 0
      %949 = vmatpush1.bf16.xpose.msra.mxu0 0
      %950 = vmatprep.subr.bf16.mxu0 0
      %951 = vmatpush1.bf16.xpose.msra.mxu0 0
      %952 = vmatprep.subr.bf16.mxu0 0
      %953 = vmatpush1.bf16.xpose.msra.mxu0 0
      %954 = vmatprep.subr.bf16.mxu0 0
      %955 = vmatpush1.bf16.xpose.msra.mxu0 0
      %956 = vmatprep.subr.bf16.mxu0 0
      %957 = vmatpush1.bf16.xpose.msra.mxu0 0
      %958 = vmatprep.mubr.bf16.mxu0 0
      %959 = vmatmul.mubr.bf16.gmra.mrb[0].mxu0 %v921
      %v960 = vpop.f32.mrb[0].mxu0
      %v961 = vadd.f32 0.0, %v960
      %v962 = vpop.f32.mrb[0].mxu0
      %v963 = vpop.f32.mrb[0].mxu0
      %v964 = vadd.f32 0.0, %v963
      %v965 = vpop.f32.mrb[0].mxu0
      %966 = vdwg.mxu0
      %v967 = vmul.f32 %v961, 0.25
      %v968 = vmul.f32 %v964, 0.25
      %v969 = vadd.f32 %v967, %v844
      %v970 = vadd.f32 %v968, %v845
      %v971 = vsel %vm919, %v969, -inf
      %972 = vmax.xlane.f32.xlu0 %v971
      %v973 = vpop.xlane.xlu0 %972
      %v974 = vsel %vm919, %v970, -inf
      %975 = vmax.xlane.f32.xlu0 %v974
      %v976 = vpop.xlane.xlu0 %975
      %v977 = vsub.f32 %v969, %v973
      %v978 = vsub.f32 %v970, %v976
      %v979 = vmul.f32 %v977, 1.442695
      %v980 = vpow.pop %v979
      %v981 = vmul.f32 %v978, 1.442695
      %v982 = vpow.pop %v981
      %v983 = vsel %vm919, %v980, 0.0
      %984 = vadd.xlane.f32.xlu0 %v983
      %v985 = vpop.xlane.xlu0 %984
      %v986 = vsel %vm919, %v982, 0.0
      %987 = vadd.xlane.f32.xlu0 %v986
      %v988 = vpop.xlane.xlu0 %987
      %v989 = vrcp.pop %v985
      %v990 = vrcp.pop %v988
      %v991 = vmul.f32 %v980, %v989
      %v992 = vmul.f32 %v982, %v990
      %v993 = vpack.c.bf16 %v992, %v991
      %994 = vrot.lane.b32.xlu0 %v915, 64
      %v995 = vpop.permute.xlu0 %994
      %v998 = vsel %vm919, %v993, 0
      %1000 = vmatprep.subr.bf16.mxu0 0
      %1001 = vmatpush1.bf16.msra.mxu0 %v995
      %1002 = vmatprep.subr.bf16.mxu0 0
      %1003 = vmatpush1.bf16.msra.mxu0 0
      %1004 = vmatprep.subr.bf16.mxu0 0
      %1005 = vmatpush1.bf16.msra.mxu0 0
      %1006 = vmatprep.subr.bf16.mxu0 0
      %1007 = vmatpush1.bf16.msra.mxu0 0
      %1008 = vmatprep.subr.bf16.mxu0 0
      %1009 = vmatpush1.bf16.msra.mxu0 0
      %1010 = vmatprep.subr.bf16.mxu0 0
      %1011 = vmatpush1.bf16.msra.mxu0 0
      %1012 = vmatprep.subr.bf16.mxu0 0
      %1013 = vmatpush1.bf16.msra.mxu0 0
      %1014 = vmatprep.subr.bf16.mxu0 0
      %1015 = vmatpush1.bf16.msra.mxu0 0
      %1016 = vmatprep.subr.bf16.mxu0 0
      %1017 = vmatpush1.bf16.msra.mxu0 0
      %1018 = vmatprep.subr.bf16.mxu0 0
      %1019 = vmatpush1.bf16.msra.mxu0 0
      %1020 = vmatprep.subr.bf16.mxu0 0
      %1021 = vmatpush1.bf16.msra.mxu0 0
      %1022 = vmatprep.subr.bf16.mxu0 0
      %1023 = vmatpush1.bf16.msra.mxu0 0
      %1024 = vmatprep.subr.bf16.mxu0 0
      %1025 = vmatpush1.bf16.msra.mxu0 0
      %1026 = vmatprep.subr.bf16.mxu0 0
      %1027 = vmatpush1.bf16.msra.mxu0 0
      %1028 = vmatprep.subr.bf16.mxu0 0
      %1029 = vmatpush1.bf16.msra.mxu0 0
      %1030 = vmatprep.subr.bf16.mxu0 0
      %1031 = vmatpush1.bf16.msra.mxu0 0
      %1032 = vmatprep.mubr.bf16.mxu0 0
      %1033 = vmatmul.mubr.bf16.gmra.mrb[0].mxu0 %v998
      %v1034 = vpop.f32.mrb[0].mxu0
      %v1035 = vadd.f32 0.0, %v1034
      %v1036 = vpop.f32.mrb[0].mxu0
      %v1037 = vpop.f32.mrb[0].mxu0
      %v1038 = vadd.f32 0.0, %v1037
      %v1039 = vpop.f32.mrb[0].mxu0
      %1040 = vdwg.mxu0
      %1041 = vrot.lane.b32.xlu0 %v915, 112
      %v1042 = vpop.permute.xlu0 %1041
      %1043 = vrot.lane.b32.xlu0 %v915, 80
      %v1044 = vpop.permute.xlu0 %1043
      %v1046 = vsel %vm919, %v1042, 0
      %v1049 = vsel %vm919, %v1044, 0
      %1051 = vmatprep.subr.bf16.mxu0 0
      %1052 = vmatpush1.bf16.xpose.msra.mxu0 %v1049
      %1053 = vmatprep.subr.bf16.mxu0 0
      %1054 = vmatpush1.bf16.xpose.msra.mxu0 0
      %1055 = vmatprep.subr.bf16.mxu0 0
      %1056 = vmatpush1.bf16.xpose.msra.mxu0 0
      %1057 = vmatprep.subr.bf16.mxu0 0
      %1058 = vmatpush1.bf16.xpose.msra.mxu0 0
      %1059 = vmatprep.subr.bf16.mxu0 0
      %1060 = vmatpush1.bf16.xpose.msra.mxu0 0
      %1061 = vmatprep.subr.bf16.mxu0 0
      %1062 = vmatpush1.bf16.xpose.msra.mxu0 0
      %1063 = vmatprep.subr.bf16.mxu0 0
      %1064 = vmatpush1.bf16.xpose.msra.mxu0 0
      %1065 = vmatprep.subr.bf16.mxu0 0
      %1066 = vmatpush1.bf16.xpose.msra.mxu0 0
      %1067 = vmatprep.subr.bf16.mxu0 0
      %1068 = vmatpush1.bf16.xpose.msra.mxu0 0
      %1069 = vmatprep.subr.bf16.mxu0 0
      %1070 = vmatpush1.bf16.xpose.msra.mxu0 0
      %1071 = vmatprep.subr.bf16.mxu0 0
      %1072 = vmatpush1.bf16.xpose.msra.mxu0 0
      %1073 = vmatprep.subr.bf16.mxu0 0
      %1074 = vmatpush1.bf16.xpose.msra.mxu0 0
      %1075 = vmatprep.subr.bf16.mxu0 0
      %1076 = vmatpush1.bf16.xpose.msra.mxu0 0
      %1077 = vmatprep.subr.bf16.mxu0 0
      %1078 = vmatpush1.bf16.xpose.msra.mxu0 0
      %1079 = vmatprep.subr.bf16.mxu0 0
      %1080 = vmatpush1.bf16.xpose.msra.mxu0 0
      %1081 = vmatprep.subr.bf16.mxu0 0
      %1082 = vmatpush1.bf16.xpose.msra.mxu0 0
      %1083 = vmatprep.mubr.bf16.mxu0 0
      %1084 = vmatmul.mubr.bf16.gmra.mrb[0].mxu0 %v1046
      %v1085 = vpop.f32.mrb[0].mxu0
      %v1086 = vadd.f32 0.0, %v1085
      %v1087 = vpop.f32.mrb[0].mxu0
      %v1088 = vpop.f32.mrb[0].mxu0
      %v1089 = vadd.f32 0.0, %v1088
      %v1090 = vpop.f32.mrb[0].mxu0
      %1091 = vdwg.mxu0
      %v1092 = vmul.f32 %v1086, 0.25
      %v1093 = vmul.f32 %v1089, 0.25
      %v1094 = vadd.f32 %v1092, %v844
      %v1095 = vadd.f32 %v1093, %v845
      %v1096 = vsel %vm919, %v1094, -inf
      %1097 = vmax.xlane.f32.xlu0 %v1096
      %v1098 = vpop.xlane.xlu0 %1097
      %v1099 = vsel %vm919, %v1095, -inf
      %1100 = vmax.xlane.f32.xlu0 %v1099
      %v1101 = vpop.xlane.xlu0 %1100
      %v1102 = vsub.f32 %v1094, %v1098
      %v1103 = vsub.f32 %v1095, %v1101
      %v1104 = vmul.f32 %v1102, 1.442695
      %v1105 = vpow.pop %v1104
      %v1106 = vmul.f32 %v1103, 1.442695
      %v1107 = vpow.pop %v1106
      %v1108 = vsel %vm919, %v1105, 0.0
      %1109 = vadd.xlane.f32.xlu0 %v1108
      %v1110 = vpop.xlane.xlu0 %1109
      %v1111 = vsel %vm919, %v1107, 0.0
      %1112 = vadd.xlane.f32.xlu0 %v1111
      %v1113 = vpop.xlane.xlu0 %1112
      %v1114 = vrcp.pop %v1110
      %v1115 = vrcp.pop %v1113
      %v1116 = vmul.f32 %v1105, %v1114
      %v1117 = vmul.f32 %v1107, %v1115
      %v1118 = vpack.c.bf16 %v1117, %v1116
      %1119 = vrot.lane.b32.xlu0 %v915, 48
      %v1120 = vpop.permute.xlu0 %1119
      %v1123 = vsel %vm919, %v1118, 0
      %1125 = vmatprep.subr.bf16.mxu0 0
      %1126 = vmatpush1.bf16.msra.mxu0 %v1120
      %1127 = vmatprep.subr.bf16.mxu0 0
      %1128 = vmatpush1.bf16.msra.mxu0 0
      %1129 = vmatprep.subr.bf16.mxu0 0
      %1130 = vmatpush1.bf16.msra.mxu0 0
      %1131 = vmatprep.subr.bf16.mxu0 0
      %1132 = vmatpush1.bf16.msra.mxu0 0
      %1133 = vmatprep.subr.bf16.mxu0 0
      %1134 = vmatpush1.bf16.msra.mxu0 0
      %1135 = vmatprep.subr.bf16.mxu0 0
      %1136 = vmatpush1.bf16.msra.mxu0 0
      %1137 = vmatprep.subr.bf16.mxu0 0
      %1138 = vmatpush1.bf16.msra.mxu0 0
      %1139 = vmatprep.subr.bf16.mxu0 0
      %1140 = vmatpush1.bf16.msra.mxu0 0
      %1141 = vmatprep.subr.bf16.mxu0 0
      %1142 = vmatpush1.bf16.msra.mxu0 0
      %1143 = vmatprep.subr.bf16.mxu0 0
      %1144 = vmatpush1.bf16.msra.mxu0 0
      %1145 = vmatprep.subr.bf16.mxu0 0
      %1146 = vmatpush1.bf16.msra.mxu0 0
      %1147 = vmatprep.subr.bf16.mxu0 0
      %1148 = vmatpush1.bf16.msra.mxu0 0
      %1149 = vmatprep.subr.bf16.mxu0 0
      %1150 = vmatpush1.bf16.msra.mxu0 0
      %1151 = vmatprep.subr.bf16.mxu0 0
      %1152 = vmatpush1.bf16.msra.mxu0 0
      %1153 = vmatprep.subr.bf16.mxu0 0
      %1154 = vmatpush1.bf16.msra.mxu0 0
      %1155 = vmatprep.subr.bf16.mxu0 0
      %1156 = vmatpush1.bf16.msra.mxu0 0
      %1157 = vmatprep.mubr.bf16.mxu0 0
      %1158 = vmatmul.mubr.bf16.gmra.mrb[0].mxu0 %v1123
      %v1159 = vpop.f32.mrb[0].mxu0
      %v1160 = vadd.f32 0.0, %v1159
      %v1161 = vpop.f32.mrb[0].mxu0
      %v1162 = vpop.f32.mrb[0].mxu0
      %v1163 = vadd.f32 0.0, %v1162
      %v1164 = vpop.f32.mrb[0].mxu0
      %1165 = vdwg.mxu0
      %1168 = vrot.lane.b32.xlu0 %v1160, 16
      %v1169 = vpop.permute.xlu0 %1168
      %1170 = vrot.lane.b32.xlu0 %v1163, 16
      %v1171 = vpop.permute.xlu0 %1170
      %v1174 = vsel %vm919, %v1035, %v1169
      %v1175 = vsel %vm919, %v1038, %v1171
      %v1176 = vpack.c.bf16 %v1175, %v1174
      %v1177 = vld [vmem:[%s755] sm:$0xf]
      %v1178 = vld [vmem:[%s755 + $0x4] sm:$0xf]
      %v1179 = vld [vmem:[%s755 + $0x8] sm:$0xf]
      %v1180 = vld [vmem:[%s755 + $0xc] sm:$0xf]
      %v1181 = vld [vmem:[%s758] sm:$0x1]
      %v1183 = vlaneseq
      %v1184 = vshrl.u32 %v1183, 7
      %v1185 = vsub.s32 0, %v1184
      %v1186 = vrot.slane %v1181, %v1185
      %v1192 = vunpack.c.l.b16 %v1177
      %v1193 = vunpack.c.l.b16 %v1178
      %v1194 = vunpack.c.l.b16 %v1179
      %v1195 = vunpack.c.l.b16 %v1180
      %v1196 = vpack.c.b16 %v1193, %v1192
      %v1197 = vpack.c.b16 %v1195, %v1194
      %v1201 = vsel %vm870, %v1176, 0
      %1203 = vmatprep.subr.bf16.mxu0 0
      %1204 = vmatpush1.bf16.msra.mxu0 %v1196
      %1205 = vmatprep.subr.bf16.mxu0 0
      %1206 = vmatpush1.bf16.msra.mxu0 %v1197
      %1207 = vmatprep.subr.bf16.mxu0 0
      %1208 = vmatpush1.bf16.msra.mxu0 0
      %1209 = vmatprep.subr.bf16.mxu0 0
      %1210 = vmatpush1.bf16.msra.mxu0 0
      %1211 = vmatprep.subr.bf16.mxu0 0
      %1212 = vmatpush1.bf16.msra.mxu0 0
      %1213 = vmatprep.subr.bf16.mxu0 0
      %1214 = vmatpush1.bf16.msra.mxu0 0
      %1215 = vmatprep.subr.bf16.mxu0 0
      %1216 = vmatpush1.bf16.msra.mxu0 0
      %1217 = vmatprep.subr.bf16.mxu0 0
      %1218 = vmatpush1.bf16.msra.mxu0 0
      %1219 = vmatprep.subr.bf16.mxu0 0
      %1220 = vmatpush1.bf16.msra.mxu0 0
      %1221 = vmatprep.subr.bf16.mxu0 0
      %1222 = vmatpush1.bf16.msra.mxu0 0
      %1223 = vmatprep.subr.bf16.mxu0 0
      %1224 = vmatpush1.bf16.msra.mxu0 0
      %1225 = vmatprep.subr.bf16.mxu0 0
      %1226 = vmatpush1.bf16.msra.mxu0 0
      %1227 = vmatprep.subr.bf16.mxu0 0
      %1228 = vmatpush1.bf16.msra.mxu0 0
      %1229 = vmatprep.subr.bf16.mxu0 0
      %1230 = vmatpush1.bf16.msra.mxu0 0
      %1231 = vmatprep.subr.bf16.mxu0 0
      %1232 = vmatpush1.bf16.msra.mxu0 0
      %1233 = vmatprep.subr.bf16.mxu0 0
      %1234 = vmatpush1.bf16.msra.mxu0 0
      %1235 = vmatprep.mubr.bf16.mxu0 0
      %1236 = vmatmul.mubr.bf16.gmra.mrb[0].mxu0 %v1201
      %v1237 = vpop.f32.mrb[0].mxu0
      %v1238 = vadd.f32 %v1186, %v1237
      %v1239 = vpop.f32.mrb[0].mxu0
      %v1240 = vpop.f32.mrb[0].mxu0
      %v1241 = vadd.f32 %v1186, %v1240
      %v1242 = vpop.f32.mrb[0].mxu0
      %1243 = vdwg.mxu0
      %v1244 = vadd.f32 %v1238, %v842
      %v1245 = vadd.f32 %v1241, %v843
      %v1246 = vld [vmem:[%s761] sm:$0x1]
      %v1247 = vld [vmem:[%s764] sm:$0x1]
      %v1248 = vsel %vm870, %v1244, 0.0
      %1249 = vadd.xlane.f32.xlu0 %v1248
      %v1250 = vpop.xlane.xlu0 %1249
      %v1251 = vsel %vm870, %v1245, 0.0
      %1252 = vadd.xlane.f32.xlu0 %v1251
      %v1253 = vpop.xlane.xlu0 %1252
      %v1254 = vrcp.pop 32.0
      %v1255 = vmul.f32 %v1250, %v1254
      %v1256 = vmul.f32 %v1253, %v1254
      %v1257 = vsub.f32 %v1244, %v1255
      %v1258 = vsub.f32 %v1245, %v1256
      %v1259 = vmul.f32 %v1257, %v1257
      %v1260 = vmul.f32 %v1258, %v1258
      %v1261 = vsel %vm870, %v1259, 0.0
      %1262 = vadd.xlane.f32.xlu0 %v1261
      %v1263 = vpop.xlane.xlu0 %1262
      %v1264 = vsel %vm870, %v1260, 0.0
      %1265 = vadd.xlane.f32.xlu0 %v1264
      %v1266 = vpop.xlane.xlu0 %1265
      %v1267 = vmul.f32 %v1263, %v1254
      %v1268 = vmul.f32 %v1266, %v1254
      %v1269 = vadd.f32 %v1267, 1e-12
      %v1270 = vadd.f32 %v1268, 1e-12
      %v1271 = vrsqrt.pop %v1269
      %v1272 = vrsqrt.pop %v1270
      %v1273 = vmul.f32 %v1257, %v1271
      %v1274 = vmul.f32 %v1258, %v1272
      %v1276 = vlaneseq
      %v1277 = vshrl.u32 %v1276, 7
      %v1278 = vsub.s32 0, %v1277
      %v1279 = vrot.slane %v1246, %v1278
      %v1281 = vmul.f32 %v1273, %v1279
      %v1282 = vmul.f32 %v1274, %v1279
      %v1284 = vlaneseq
      %v1285 = vshrl.u32 %v1284, 7
      %v1286 = vsub.s32 0, %v1285
      %v1287 = vrot.slane %v1247, %v1286
      %v1289 = vadd.f32 %v1281, %v1287
      %v1290 = vadd.f32 %v1282, %v1287
      %v1291 = vpack.c.bf16 %v1290, %v1289
      %v1292 = vld [vmem:[%s769] sm:$0xf]
      %v1293 = vld [vmem:[%s769 + $0x4] sm:$0xf]
      %v1294 = vld [vmem:[%s769 + $0x8] sm:$0xf]
      %v1295 = vld [vmem:[%s769 + $0xc] sm:$0xf]
      %v1296 = vld [vmem:[%s772] sm:$0x1]
      %v1298 = vlaneseq
      %v1299 = vshrl.u32 %v1298, 7
      %v1300 = vsub.s32 0, %v1299
      %v1301 = vrot.slane %v1296, %v1300
      %v1307 = vunpack.c.l.b16 %v1292
      %v1308 = vunpack.c.l.b16 %v1293
      %v1309 = vunpack.c.l.b16 %v1294
      %v1310 = vunpack.c.l.b16 %v1295
      %v1311 = vpack.c.b16 %v1308, %v1307
      %v1312 = vpack.c.b16 %v1310, %v1309
      %v1316 = vsel %vm870, %v1291, 0
      %1318 = vmatprep.subr.bf16.mxu0 0
      %1319 = vmatpush1.bf16.msra.mxu0 %v1311
      %1320 = vmatprep.subr.bf16.mxu0 0
      %1321 = vmatpush1.bf16.msra.mxu0 %v1312
      %1322 = vmatprep.subr.bf16.mxu0 0
      %1323 = vmatpush1.bf16.msra.mxu0 0
      %1324 = vmatprep.subr.bf16.mxu0 0
      %1325 = vmatpush1.bf16.msra.mxu0 0
      %1326 = vmatprep.subr.bf16.mxu0 0
      %1327 = vmatpush1.bf16.msra.mxu0 0
      %1328 = vmatprep.subr.bf16.mxu0 0
      %1329 = vmatpush1.bf16.msra.mxu0 0
      %1330 = vmatprep.subr.bf16.mxu0 0
      %1331 = vmatpush1.bf16.msra.mxu0 0
      %1332 = vmatprep.subr.bf16.mxu0 0
      %1333 = vmatpush1.bf16.msra.mxu0 0
      %1334 = vmatprep.subr.bf16.mxu0 0
      %1335 = vmatpush1.bf16.msra.mxu0 0
      %1336 = vmatprep.subr.bf16.mxu0 0
      %1337 = vmatpush1.bf16.msra.mxu0 0
      %1338 = vmatprep.subr.bf16.mxu0 0
      %1339 = vmatpush1.bf16.msra.mxu0 0
      %1340 = vmatprep.subr.bf16.mxu0 0
      %1341 = vmatpush1.bf16.msra.mxu0 0
      %1342 = vmatprep.subr.bf16.mxu0 0
      %1343 = vmatpush1.bf16.msra.mxu0 0
      %1344 = vmatprep.subr.bf16.mxu0 0
      %1345 = vmatpush1.bf16.msra.mxu0 0
      %1346 = vmatprep.subr.bf16.mxu0 0
      %1347 = vmatpush1.bf16.msra.mxu0 0
      %1348 = vmatprep.subr.bf16.mxu0 0
      %1349 = vmatpush1.bf16.msra.mxu0 0
      %1350 = vmatprep.mubr.bf16.mxu0 0
      %1351 = vmatmul.mubr.bf16.gmra.mrb[0].mxu0 %v1316
      %v1352 = vpop.f32.mrb[0].mxu0
      %v1353 = vadd.f32 %v1301, %v1352
      %v1354 = vpop.f32.mrb[0].mxu0
      %v1355 = vpop.f32.mrb[0].mxu0
      %v1356 = vadd.f32 %v1301, %v1355
      %v1357 = vpop.f32.mrb[0].mxu0
      %1358 = vdwg.mxu0
      %v1359 = vmul.f32 %v1353, %v1353
      %v1360 = vmul.f32 %v1356, %v1356
      %v1361 = vmul.f32 %v1353, %v1359
      %v1362 = vmul.f32 %v1356, %v1360
      %v1363 = vmul.f32 %v1361, 0.044715
      %v1364 = vmul.f32 %v1362, 0.044715
      %v1365 = vadd.f32 %v1353, %v1363
      %v1366 = vadd.f32 %v1356, %v1364
      %v1367 = vmul.f32 %v1365, 0.7978846
      %v1368 = vmul.f32 %v1366, 0.7978846
      %v1369 = vtanh.pop %v1367
      %v1370 = vtanh.pop %v1368
      %v1371 = vadd.f32 %v1369, 1.0
      %v1372 = vadd.f32 %v1370, 1.0
      %v1373 = vmul.f32 %v1371, 0.5
      %v1374 = vmul.f32 %v1372, 0.5
      %v1375 = vmul.f32 %v1353, %v1373
      %v1376 = vmul.f32 %v1356, %v1374
      %v1377 = vpack.c.bf16 %v1376, %v1375
      %v1378 = vld [vmem:[%s777] sm:$0xf]
      %v1379 = vld [vmem:[%s777 + $0x4] sm:$0xf]
      %v1380 = vld [vmem:[%s777 + $0x8] sm:$0xf]
      %v1381 = vld [vmem:[%s777 + $0xc] sm:$0xf]
      %v1382 = vld [vmem:[%s777 + $0x10] sm:$0xf]
      %v1383 = vld [vmem:[%s777 + $0x14] sm:$0xf]
      %v1384 = vld [vmem:[%s777 + $0x18] sm:$0xf]
      %v1385 = vld [vmem:[%s777 + $0x1c] sm:$0xf]
      %v1386 = vld [vmem:[%s777 + $0x20] sm:$0xf]
      %v1387 = vld [vmem:[%s777 + $0x24] sm:$0xf]
      %v1388 = vld [vmem:[%s777 + $0x28] sm:$0xf]
      %v1389 = vld [vmem:[%s777 + $0x2c] sm:$0xf]
      %v1390 = vld [vmem:[%s777 + $0x30] sm:$0xf]
      %v1391 = vld [vmem:[%s777 + $0x34] sm:$0xf]
      %v1392 = vld [vmem:[%s777 + $0x38] sm:$0xf]
      %v1393 = vld [vmem:[%s777 + $0x3c] sm:$0xf]
      %v1394 = vld [vmem:[%s780] sm:$0x1]
      %v1396 = vlaneseq
      %v1397 = vshrl.u32 %v1396, 7
      %v1398 = vsub.s32 0, %v1397
      %v1399 = vrot.slane %v1394, %v1398
      %v1417 = vunpack.c.l.b16 %v1378
      %v1418 = vunpack.c.l.b16 %v1379
      %v1419 = vunpack.c.l.b16 %v1380
      %v1420 = vunpack.c.l.b16 %v1381
      %v1421 = vunpack.c.l.b16 %v1382
      %v1422 = vunpack.c.l.b16 %v1383
      %v1423 = vunpack.c.l.b16 %v1384
      %v1424 = vunpack.c.l.b16 %v1385
      %v1425 = vunpack.c.l.b16 %v1386
      %v1426 = vunpack.c.l.b16 %v1387
      %v1427 = vunpack.c.l.b16 %v1388
      %v1428 = vunpack.c.l.b16 %v1389
      %v1429 = vunpack.c.l.b16 %v1390
      %v1430 = vunpack.c.l.b16 %v1391
      %v1431 = vunpack.c.l.b16 %v1392
      %v1432 = vunpack.c.l.b16 %v1393
      %v1433 = vpack.c.b16 %v1418, %v1417
      %v1434 = vpack.c.b16 %v1420, %v1419
      %v1435 = vpack.c.b16 %v1422, %v1421
      %v1436 = vpack.c.b16 %v1424, %v1423
      %v1437 = vpack.c.b16 %v1426, %v1425
      %v1438 = vpack.c.b16 %v1428, %v1427
      %v1439 = vpack.c.b16 %v1430, %v1429
      %v1440 = vpack.c.b16 %v1432, %v1431
      %1449 = vmatprep.subr.bf16.mxu0 0
      %1450 = vmatpush1.bf16.msra.mxu0 %v1433
      %1451 = vmatprep.subr.bf16.mxu0 0
      %1452 = vmatpush1.bf16.msra.mxu0 %v1434
      %1453 = vmatprep.subr.bf16.mxu0 0
      %1454 = vmatpush1.bf16.msra.mxu0 %v1435
      %1455 = vmatprep.subr.bf16.mxu0 0
      %1456 = vmatpush1.bf16.msra.mxu0 %v1436
      %1457 = vmatprep.subr.bf16.mxu0 0
      %1458 = vmatpush1.bf16.msra.mxu0 %v1437
      %1459 = vmatprep.subr.bf16.mxu0 0
      %1460 = vmatpush1.bf16.msra.mxu0 %v1438
      %1461 = vmatprep.subr.bf16.mxu0 0
      %1462 = vmatpush1.bf16.msra.mxu0 %v1439
      %1463 = vmatprep.subr.bf16.mxu0 0
      %1464 = vmatpush1.bf16.msra.mxu0 %v1440
      %1465 = vmatprep.subr.bf16.mxu0 0
      %1466 = vmatpush1.bf16.msra.mxu0 0
      %1467 = vmatprep.subr.bf16.mxu0 0
      %1468 = vmatpush1.bf16.msra.mxu0 0
      %1469 = vmatprep.subr.bf16.mxu0 0
      %1470 = vmatpush1.bf16.msra.mxu0 0
      %1471 = vmatprep.subr.bf16.mxu0 0
      %1472 = vmatpush1.bf16.msra.mxu0 0
      %1473 = vmatprep.subr.bf16.mxu0 0
      %1474 = vmatpush1.bf16.msra.mxu0 0
      %1475 = vmatprep.subr.bf16.mxu0 0
      %1476 = vmatpush1.bf16.msra.mxu0 0
      %1477 = vmatprep.subr.bf16.mxu0 0
      %1478 = vmatpush1.bf16.msra.mxu0 0
      %1479 = vmatprep.subr.bf16.mxu0 0
      %1480 = vmatpush1.bf16.msra.mxu0 0
      %1481 = vmatprep.mubr.bf16.mxu0 0
      %1482 = vmatmul.mubr.bf16.gmra.mrb[0].mxu0 %v1377
      %v1483 = vpop.f32.mrb[0].mxu0
      %v1484 = vadd.f32 %v1399, %v1483
      %v1485 = vpop.f32.mrb[0].mxu0
      %v1486 = vpop.f32.mrb[0].mxu0
      %v1487 = vadd.f32 %v1399, %v1486
      %v1488 = vpop.f32.mrb[0].mxu0
      %1489 = vdwg.mxu0
      %v1490 = vadd.f32 %v1484, %v1289
      %v1491 = vadd.f32 %v1487, %v1290
      %v1492 = vld [vmem:[%s783] sm:$0x1]
      %v1493 = vld [vmem:[%s786] sm:$0x1]
      %v1494 = vsel %vm870, %v1490, 0.0
      %1495 = vadd.xlane.f32.xlu0 %v1494
      %v1496 = vpop.xlane.xlu0 %1495
      %v1497 = vsel %vm870, %v1491, 0.0
      %1498 = vadd.xlane.f32.xlu0 %v1497
      %v1499 = vpop.xlane.xlu0 %1498
      %v1500 = vmul.f32 %v1496, %v1254
      %v1501 = vmul.f32 %v1499, %v1254
      %v1502 = vsub.f32 %v1490, %v1500
      %v1503 = vsub.f32 %v1491, %v1501
      %v1504 = vmul.f32 %v1502, %v1502
      %v1505 = vmul.f32 %v1503, %v1503
      %v1506 = vsel %vm870, %v1504, 0.0
      %1507 = vadd.xlane.f32.xlu0 %v1506
      %v1508 = vpop.xlane.xlu0 %1507
      %v1509 = vsel %vm870, %v1505, 0.0
      %1510 = vadd.xlane.f32.xlu0 %v1509
      %v1511 = vpop.xlane.xlu0 %1510
      %v1512 = vmul.f32 %v1508, %v1254
      %v1513 = vmul.f32 %v1511, %v1254
      %v1514 = vadd.f32 %v1512, 1e-12
      %v1515 = vadd.f32 %v1513, 1e-12
      %v1516 = vrsqrt.pop %v1514
      %v1517 = vrsqrt.pop %v1515
      %v1518 = vmul.f32 %v1502, %v1516
      %v1519 = vmul.f32 %v1503, %v1517
      %v1521 = vlaneseq
      %v1522 = vshrl.u32 %v1521, 7
      %v1523 = vsub.s32 0, %v1522
      %v1524 = vrot.slane %v1492, %v1523
      %v1526 = vmul.f32 %v1518, %v1524
      %v1527 = vmul.f32 %v1519, %v1524
      %v1529 = vlaneseq
      %v1530 = vshrl.u32 %v1529, 7
      %v1531 = vsub.s32 0, %v1530
      %v1532 = vrot.slane %v1493, %v1531
      %v1534 = vadd.f32 %v1526, %v1532
      %v1535 = vadd.f32 %v1527, %v1532
      %1536 = vst.msk [vmem:[#allocation2] sm:$0xff] %vm870, %v1534
      %1537 = vst.msk [vmem:[#allocation2 + $0x8] sm:$0xff] %vm870, %v1535
      %p1538 = scmp.eq.s32.totalorder %s31, 1
      // Predicated region
      $region105: #{bert_multilabel_forward.1} parent=99 // pred_check
        %p1539 = pneg %p1538
      $region106: #{bert_multilabel_forward.1} parent=99 // pred_check_branch
        %1541 = sbr.rel (%p1539) target = $region108
      $region107: #{bert_multilabel_forward.1} parent=99 // pred_region
        %v1543 = vrot.slane %v1535, 7
        %vm1545 = vcmask 1040384
        %v1546 = vsel %vm1545, %v1534, %v1543
        %v1547 = vpack.c.bf16 %v1546, %v1546
        %v1548 = vld [vmem:[%s16] sm:$0xf]
        %v1549 = vld [vmem:[%s16 + $0x4] sm:$0xf]
        %v1550 = vld [vmem:[%s16 + $0x8] sm:$0xf]
        %v1551 = vld [vmem:[%s16 + $0xc] sm:$0xf]
        %v1552 = vld [vmem:[%s17] sm:$0x1]
        %v1554 = vlaneseq
        %v1555 = vshrl.u32 %v1554, 7
        %v1556 = vsub.s32 0, %v1555
        %v1557 = vrot.slane %v1552, %v1556
        %v1563 = vunpack.c.l.b16 %v1548
        %v1564 = vunpack.c.l.b16 %v1549
        %v1565 = vunpack.c.l.b16 %v1550
        %v1566 = vunpack.c.l.b16 %v1551
        %v1567 = vpack.c.b16 %v1564, %v1563
        %v1568 = vpack.c.b16 %v1566, %v1565
        %v1572 = vsel %vm870, %v1547, 0
        %1574 = vmatprep.subr.bf16.mxu0 0
        %1575 = vmatpush1.bf16.msra.mxu0 %v1567
        %1576 = vmatprep.subr.bf16.mxu0 0
        %1577 = vmatpush1.bf16.msra.mxu0 %v1568
        %1578 = vmatprep.subr.bf16.mxu0 0
        %1579 = vmatpush1.bf16.msra.mxu0 0
        %1580 = vmatprep.subr.bf16.mxu0 0
        %1581 = vmatpush1.bf16.msra.mxu0 0
        %1582 = vmatprep.subr.bf16.mxu0 0
        %1583 = vmatpush1.bf16.msra.mxu0 0
        %1584 = vmatprep.subr.bf16.mxu0 0
        %1585 = vmatpush1.bf16.msra.mxu0 0
        %1586 = vmatprep.subr.bf16.mxu0 0
        %1587 = vmatpush1.bf16.msra.mxu0 0
        %1588 = vmatprep.subr.bf16.mxu0 0
        %1589 = vmatpush1.bf16.msra.mxu0 0
        %1590 = vmatprep.subr.bf16.mxu0 0
        %1591 = vmatpush1.bf16.msra.mxu0 0
        %1592 = vmatprep.subr.bf16.mxu0 0
        %1593 = vmatpush1.bf16.msra.mxu0 0
        %1594 = vmatprep.subr.bf16.mxu0 0
        %1595 = vmatpush1.bf16.msra.mxu0 0
        %1596 = vmatprep.subr.bf16.mxu0 0
        %1597 = vmatpush1.bf16.msra.mxu0 0
        %1598 = vmatprep.subr.bf16.mxu0 0
        %1599 = vmatpush1.bf16.msra.mxu0 0
        %1600 = vmatprep.subr.bf16.mxu0 0
        %1601 = vmatpush1.bf16.msra.mxu0 0
        %1602 = vmatprep.subr.bf16.mxu0 0
        %1603 = vmatpush1.bf16.msra.mxu0 0
        %1604 = vmatprep.subr.bf16.mxu0 0
        %1605 = vmatpush1.bf16.msra.mxu0 0
        %1606 = vmatprep.mubr.bf16.mxu0 0
        %1607 = vmatmul.mubr.bf16.gmra.mrb[0].mxu0 %v1572
        %v1608 = vpop.f32.mrb[0].mxu0
        %v1609 = vadd.f32 %v1557, %v1608
        %v1610 = vpop.f32.mrb[0].mxu0
        %v1611 = vpop.f32.mrb[0].mxu0
        %v1612 = vpop.f32.mrb[0].mxu0
        %1613 = vdwg.mxu0
        %v1614 = vtanh.pop %v1609
        %v1615 = vpack.c.bf16 %v1614, %v1614
        %v1616 = vld [vmem:[%s18] sm:$0xf]
        %v1617 = vld [vmem:[%s18 + $0x4] sm:$0xf]
        %v1618 = vld [vmem:[%s18 + $0x8] sm:$0xf]
        %v1619 = vld [vmem:[%s18 + $0xc] sm:$0xf]
        %v1620 = vld [vmem:[%s19] sm:$0x1]
        %v1622 = vlaneseq
        %v1623 = vshrl.u32 %v1622, 7
        %v1624 = vsub.s32 0, %v1623
        %v1625 = vrot.slane %v1620, %v1624
        %v1631 = vunpack.c.l.b16 %v1616
        %v1632 = vunpack.c.l.b16 %v1617
        %v1633 = vunpack.c.l.b16 %v1618
        %v1634 = vunpack.c.l.b16 %v1619
        %v1635 = vpack.c.b16 %v1632, %v1631
        %v1636 = vpack.c.b16 %v1634, %v1633
        %v1640 = vsel %vm870, %v1615, 0
        %1642 = vmatprep.subr.bf16.mxu0 0
        %1643 = vmatpush1.bf16.msra.mxu0 %v1635
        %1644 = vmatprep.subr.bf16.mxu0 0
        %1645 = vmatpush1.bf16.msra.mxu0 %v1636
        %1646 = vmatprep.subr.bf16.mxu0 0
        %1647 = vmatpush1.bf16.msra.mxu0 0
        %1648 = vmatprep.subr.bf16.mxu0 0
        %1649 = vmatpush1.bf16.msra.mxu0 0
        %1650 = vmatprep.subr.bf16.mxu0 0
        %1651 = vmatpush1.bf16.msra.mxu0 0
        %1652 = vmatprep.subr.bf16.mxu0 0
        %1653 = vmatpush1.bf16.msra.mxu0 0
        %1654 = vmatprep.subr.bf16.mxu0 0
        %1655 = vmatpush1.bf16.msra.mxu0 0
        %1656 = vmatprep.subr.bf16.mxu0 0
        %1657 = vmatpush1.bf16.msra.mxu0 0
        %1658 = vmatprep.subr.bf16.mxu0 0
        %1659 = vmatpush1.bf16.msra.mxu0 0
        %1660 = vmatprep.subr.bf16.mxu0 0
        %1661 = vmatpush1.bf16.msra.mxu0 0
        %1662 = vmatprep.subr.bf16.mxu0 0
        %1663 = vmatpush1.bf16.msra.mxu0 0
        %1664 = vmatprep.subr.bf16.mxu0 0
        %1665 = vmatpush1.bf16.msra.mxu0 0
        %1666 = vmatprep.subr.bf16.mxu0 0
        %1667 = vmatpush1.bf16.msra.mxu0 0
        %1668 = vmatprep.subr.bf16.mxu0 0
        %1669 = vmatpush1.bf16.msra.mxu0 0
        %1670 = vmatprep.subr.bf16.mxu0 0
        %1671 = vmatpush1.bf16.msra.mxu0 0
        %1672 = vmatprep.subr.bf16.mxu0 0
        %1673 = vmatpush1.bf16.msra.mxu0 0
        %1674 = vmatprep.mubr.bf16.mxu0 0
        %1675 = vmatmul.mubr.bf16.gmra.mrb[0].mxu0 %v1640
        %v1676 = vpop.f32.mrb[0].mxu0
        %v1677 = vadd.f32 %v1625, %v1676
        %v1678 = vpop.f32.mrb[0].mxu0
        %v1679 = vpop.f32.mrb[0].mxu0
        %v1680 = vpop.f32.mrb[0].mxu0
        %1681 = vdwg.mxu0
        %1682 = vst [vmem:[%s20] sm:$0x3] %v1677
      $region108: #{bert_multilabel_forward.1} parent=99 // pred_fallthru
        _
      // Predicated region
      $region109: #{bert_multilabel_forward.1} parent=99 // pred_check
        %p1683 = pneg %p524
      $region110: #{bert_multilabel_forward.1} parent=99 // pred_check_branch
        %1685 = sbr.rel (%p1683) target = $region112
      $region111: #{bert_multilabel_forward.1} parent=99 // pred_region
        _
      $region112: #{bert_multilabel_forward.1} parent=99 // pred_fallthru
        _
      // Predicated region
      $region113: #{bert_multilabel_forward.1} parent=99 // pred_check
        %p1686 = pneg %p524
      $region114: #{bert_multilabel_forward.1} parent=99 // pred_check_branch
        %1688 = sbr.rel (%p1686) target = $region116
      $region115: #{bert_multilabel_forward.1} parent=99 // pred_region
        _
      $region116: #{bert_multilabel_forward.1} parent=99 // pred_fallthru
        _
    $region100: #{bert_multilabel_forward.1} parent=5 // pred_fallthru
      _
    %p1689 = scmp.le.s32.totalorder 2, %s26
    // Predicated region
    $region117: #{bert_multilabel_forward.1} parent=5 // pred_check
      %p1690 = pneg %p1689
    $region118: #{bert_multilabel_forward.1} parent=5 // pred_check_branch
      %1692 = sbr.rel (%p1690) target = $region120
    $region119: #{bert_multilabel_forward.1} parent=5 // pred_region
      %s1693 = ssub.s32 %s26, 2
    $region120: #{bert_multilabel_forward.1} parent=5 // pred_fallthru
      _
  $region6: #{bert_multilabel_forward.1} parent=0 // loop_footer
    %s30 = sadd.s32 1, %s26
  $region7: #{bert_multilabel_forward.1} parent=0 // loop_footer_branch
    %25 = sbr.rel target = $region3
  $region8: #{bert_multilabel_forward.1} parent=0 // loop_exit
    _

</llo_original>
